<compile_context>
chip_gen: v5e
topology: v5e:2x2
jax: 0.10.0
libtpu: 0.0.40
codegen_flags: <defaults>
</compile_context>

<pallas_src>
import functools

import jax
import jax.numpy as jnp
from jax.experimental import pallas as pl
from jax.experimental.pallas import tpu as pltpu


def _round_up(n, m):
    return ((n + m - 1) // m) * m


def _ae_kernel(x_ref,
               w1_ref, b1_ref, w2_ref, b2_ref, w3_ref, b3_ref,
               w4_ref, b4_ref, w5_ref, b5_ref, w6_ref, b6_ref,
               dec_ref, enc_ref):
    """Full autoencoder forward for one batch tile, entirely in VMEM.

    encoder: Linear -> ReLU -> Linear -> ReLU -> Linear   (no final ReLU)
    decoder: Linear -> ReLU -> Linear -> ReLU -> Linear   (no final ReLU)
    """

    def dense(h, w_ref, b_ref, relu):
        # bf16 operands on the MXU, f32 accumulation; f32 epilogue on the VPU.
        y = jnp.dot(h.astype(w_ref.dtype), w_ref[...],
                    preferred_element_type=jnp.float32) + b_ref[...]
        return jnp.maximum(y, 0.0) if relu else y

    x = x_ref[...].astype(jnp.float32)

    # ---- encoder ----
    h = dense(x, w1_ref, b1_ref, relu=True)
    h = dense(h, w2_ref, b2_ref, relu=True)
    enc = dense(h, w3_ref, b3_ref, relu=False)          # (tile, enc_pad), lane-dense
    enc_ref[...] = enc.astype(enc_ref.dtype)

    # ---- decoder ----
    d = dense(enc, w4_ref, b4_ref, relu=True)           # padded enc cols are exactly 0
    d = dense(d, w5_ref, b5_ref, relu=True)
    dec = dense(d, w6_ref, b6_ref, relu=False)
    dec_ref[...] = dec.astype(dec_ref.dtype)

    # TODO(synk): if only the anomaly score is needed, fuse mean((dec-x)**2, -1) here and
    # emit a (tile, 1) output instead of decoded to cut HBM writeback by ~input_dim x.


@functools.partial(jax.jit, static_argnames=("batch_tile",))
def anomaly_detector_forward(x, params, batch_tile=256):
    """Runs the autoencoder forward pass. Returns (decoded, encoded)."""
    B, input_dim = x.shape
    (w1, b1), (w2, b2), (w3, b3), (w4, b4), (w5, b5), (w6, b6) = params
    enc_dim = w3.shape[1]
    enc_pad = _round_up(enc_dim, 128)

    # Lane-dense 'encoded': zero-pad the bottleneck layer out to a multiple of 128 lanes.
    # Padded columns are 0*x + 0 = 0 and the matching rows of w4 are 0, so the math is exact.
    if enc_pad != enc_dim:
        w3 = jnp.pad(w3, ((0, 0), (0, enc_pad - enc_dim)))
        b3 = jnp.pad(b3, ((0, 0), (0, enc_pad - enc_dim)))
        w4 = jnp.pad(w4, ((0, enc_pad - enc_dim), (0, 0)))

    # bf16 matmul operands; biases stay f32 for the f32 accumulate/epilogue.
    weights = [w.astype(jnp.bfloat16) for w in (w1, w2, w3, w4, w5, w6)]
    biases = [b.astype(jnp.float32) for b in (b1, b2, b3, b4, b5, b6)]
    param_list = []
    for w, b in zip(weights, biases):
        param_list += [w, b]

    # Effective batch tile: fill the MXU but never exceed the (padded) batch.
    tile = batch_tile
    if B <= tile:
        tile = max(_round_up(B, 8), 8)
    Bp = _round_up(B, tile)
    if Bp != B:
        x = jnp.pad(x, ((0, Bp - B), (0, 0)))
    grid = (Bp // tile,)

    # x is tiled over the batch axis; weights/biases are grid-invariant full blocks.
    x_spec = pl.BlockSpec((tile, input_dim), lambda i: (i, 0))

    def full_spec(arr):
        shp = arr.shape
        # NOTE: grid-invariant; pipeline_mode=pl.Buffered(1) would halve weight VMEM but is
        # skipped for portability — weights are small relative to the activation tiles.
        return pl.BlockSpec(shp, lambda i: (0,) * len(shp))

    in_specs = [x_spec] + [full_spec(p) for p in param_list]
    out_specs = [
        pl.BlockSpec((tile, input_dim), lambda i: (i, 0)),  # decoded
        pl.BlockSpec((tile, enc_pad), lambda i: (i, 0)),    # encoded (lane-dense)
    ]
    out_shape = [
        jax.ShapeDtypeStruct((Bp, input_dim), x.dtype),
        jax.ShapeDtypeStruct((Bp, enc_pad), x.dtype),
    ]

    # Explicit VMEM budget: double-buffered x/decoded/encoded tiles + double-buffered params
    # + headroom for in-kernel activation temps.  Capped well under v7x's 64 MiB.
    itemsize = x.dtype.itemsize
    vmem_need = (2 * tile * input_dim * itemsize          # x
                 + 2 * tile * input_dim * itemsize        # decoded
                 + 2 * tile * enc_pad * itemsize          # encoded
                 + 2 * sum(p.size * p.dtype.itemsize for p in param_list))
    vmem_limit = int(min(max(2 * vmem_need + (8 << 20), 32 << 20), 48 << 20))

    decoded, encoded = pl.pallas_call(
        _ae_kernel,
        out_shape=out_shape,
        grid=grid,
        in_specs=in_specs,
        out_specs=out_specs,
        compiler_params=pltpu.CompilerParams(
            dimension_semantics=("parallel",),
            vmem_limit_bytes=vmem_limit,
        ),
    )(x, *param_list)

    return decoded[:B], encoded[:B, :enc_dim]


def init_params(input_dim, hidden_dim, key):
    """Deterministic init matching the PyTorch module's layer shapes.

    Linear(in, out) -> W: (in, out), b: (1, out)  (bias kept 2-D for TPU layout).
    """
    dims = [
        (input_dim, hidden_dim),             # encoder L1
        (hidden_dim, hidden_dim // 2),       # encoder L2
        (hidden_dim // 2, hidden_dim // 4),  # encoder L3 (bottleneck)
        (hidden_dim // 4, hidden_dim // 2),  # decoder L1
        (hidden_dim // 2, hidden_dim),       # decoder L2
        (hidden_dim, input_dim),             # decoder L3
    ]
    params = []
    for (din, dout) in dims:
        key, kw, kb = jax.random.split(key, 3)
        bound = 1.0 / jnp.sqrt(din)
        w = jax.random.uniform(kw, (din, dout), jnp.float32, -bound, bound)
        b = jax.random.uniform(kb, (1, dout), jnp.float32, -bound, bound)
        params.append((w, b))
    return params


def reference_forward(x, params, cast_dtype=None):
    """Plain-JAX reference.  cast_dtype=jnp.bfloat16 emulates the kernel's operand casting."""

    def dense(h, w, b, relu):
        if cast_dtype is not None:
            y = jnp.dot(h.astype(cast_dtype), w.astype(cast_dtype),
                        preferred_element_type=jnp.float32) + b
        else:
            y = h @ w + b
        return jnp.maximum(y, 0.0) if relu else y

    (w1, b1), (w2, b2), (w3, b3), (w4, b4), (w5, b5), (w6, b6) = params
    h = dense(x, w1, b1, True)
    h = dense(h, w2, b2, True)
    enc = dense(h, w3, b3, False)
    d = dense(enc, w4, b4, True)
    d = dense(d, w5, b5, True)
    dec = dense(d, w6, b6, False)
    return dec, enc


if __name__ == "__main__":
    key = jax.random.PRNGKey(0)
    k_x, k_p = jax.random.split(key)

    batch = 512          # 2 grid steps at batch_tile=256 (keeps both v7x TCs busy)
    input_dim = 32
    hidden_dim = 32      # small analogue of the default 256; enc_dim = 8 -> padded to 128

    x = jax.random.normal(k_x, (batch, input_dim), jnp.float32)
    params = init_params(input_dim, hidden_dim, k_p)

    decoded, encoded = anomaly_detector_forward(x, params, batch_tile=256)
    jax.block_until_ready(decoded)
    jax.block_until_ready(encoded)

    # Reference with the same bf16-operand / f32-accumulate recipe the kernel uses.
    dec_ref, enc_ref = reference_forward(x, params, cast_dtype=jnp.bfloat16)

    assert decoded.shape == (batch, input_dim)
    assert encoded.shape == (batch, hidden_dim // 4)
    assert jnp.allclose(decoded, dec_ref, atol=1e-2, rtol=1e-2)
    assert jnp.allclose(encoded, enc_ref, atol=1e-2, rtol=1e-2)

    print("KERNEL_OK")
</pallas_src>

<mosaic_0001>
module attributes {stable_mosaic.version = 11 : i64} {
  func.func @_ae_kernel(%arg0: i32, %arg1: memref<256x32xf32, #tpu.memory_space<vmem>>, %arg2: memref<32x32xbf16, #tpu.memory_space<vmem>>, %arg3: memref<1x32xf32, #tpu.memory_space<vmem>>, %arg4: memref<32x16xbf16, #tpu.memory_space<vmem>>, %arg5: memref<1x16xf32, #tpu.memory_space<vmem>>, %arg6: memref<16x128xbf16, #tpu.memory_space<vmem>>, %arg7: memref<1x128xf32, #tpu.memory_space<vmem>>, %arg8: memref<128x16xbf16, #tpu.memory_space<vmem>>, %arg9: memref<1x16xf32, #tpu.memory_space<vmem>>, %arg10: memref<16x32xbf16, #tpu.memory_space<vmem>>, %arg11: memref<1x32xf32, #tpu.memory_space<vmem>>, %arg12: memref<32x32xbf16, #tpu.memory_space<vmem>>, %arg13: memref<1x32xf32, #tpu.memory_space<vmem>>, %arg14: memref<256x32xf32, #tpu.memory_space<vmem>>, %arg15: memref<256x128xf32, #tpu.memory_space<vmem>>) attributes {dimension_semantics = [#tpu.dimension_semantics<parallel>], iteration_bounds = array<i64: 2>, scalar_prefetch = 0 : i64, scratch_operands = 0 : i64, tpu.core_type = #tpu.core_type<tc>, window_params = [{transform_indices = @transform_0, window_bounds = array<i64: 256, 32>}, {pipeline_mode = #tpu.pipeline_mode<synchronous>, transform_indices = @transform_1, window_bounds = array<i64: 32, 32>}, {pipeline_mode = #tpu.pipeline_mode<synchronous>, transform_indices = @transform_2, window_bounds = array<i64: 1, 32>}, {pipeline_mode = #tpu.pipeline_mode<synchronous>, transform_indices = @transform_3, window_bounds = array<i64: 32, 16>}, {pipeline_mode = #tpu.pipeline_mode<synchronous>, transform_indices = @transform_4, window_bounds = array<i64: 1, 16>}, {pipeline_mode = #tpu.pipeline_mode<synchronous>, transform_indices = @transform_5, window_bounds = array<i64: 16, 128>}, {pipeline_mode = #tpu.pipeline_mode<synchronous>, transform_indices = @transform_6, window_bounds = array<i64: 1, 128>}, {pipeline_mode = #tpu.pipeline_mode<synchronous>, transform_indices = @transform_7, window_bounds = array<i64: 128, 16>}, {pipeline_mode = #tpu.pipeline_mode<synchronous>, transform_indices = @transform_8, window_bounds = array<i64: 1, 16>}, {pipeline_mode = #tpu.pipeline_mode<synchronous>, transform_indices = @transform_9, window_bounds = array<i64: 16, 32>}, {pipeline_mode = #tpu.pipeline_mode<synchronous>, transform_indices = @transform_10, window_bounds = array<i64: 1, 32>}, {pipeline_mode = #tpu.pipeline_mode<synchronous>, transform_indices = @transform_11, window_bounds = array<i64: 32, 32>}, {pipeline_mode = #tpu.pipeline_mode<synchronous>, transform_indices = @transform_12, window_bounds = array<i64: 1, 32>}, {transform_indices = @transform_13, window_bounds = array<i64: 256, 32>}, {transform_indices = @transform_14, window_bounds = array<i64: 256, 128>}]} {
    %c0 = arith.constant 0 : index
    %c0_0 = arith.constant 0 : index
    %0 = vector.load %arg1[%c0, %c0_0] : memref<256x32xf32, #tpu.memory_space<vmem>>, vector<256x32xf32>
    %1 = arith.truncf %0 : vector<256x32xf32> to vector<256x32xbf16>
    %c0_1 = arith.constant 0 : index
    %c0_2 = arith.constant 0 : index
    %2 = vector.load %arg2[%c0_1, %c0_2] : memref<32x32xbf16, #tpu.memory_space<vmem>>, vector<32x32xbf16>
    %cst = arith.constant dense<0.000000e+00> : vector<256x32xf32>
    %3 = tpu.matmul %1, %2, %cst {dimension_numbers = #tpu.dot_dimension_numbers<[1], [0], [0], [1], [0, 0, 1, 1], [], []>} : vector<256x32xbf16>, vector<32x32xbf16>, vector<256x32xf32> -> vector<256x32xf32>
    %c0_3 = arith.constant 0 : index
    %c0_4 = arith.constant 0 : index
    %4 = vector.load %arg3[%c0_3, %c0_4] : memref<1x32xf32, #tpu.memory_space<vmem>>, vector<1x32xf32>
    %5 = vector.broadcast %4 : vector<1x32xf32> to vector<256x32xf32>
    %6 = arith.addf %3, %5 : vector<256x32xf32>
    %cst_5 = arith.constant 0.000000e+00 : f32
    %7 = vector.broadcast %cst_5 : f32 to vector<256x32xf32>
    %8 = arith.maximumf %6, %7 : vector<256x32xf32>
    %9 = arith.truncf %8 : vector<256x32xf32> to vector<256x32xbf16>
    %c0_6 = arith.constant 0 : index
    %c0_7 = arith.constant 0 : index
    %10 = vector.load %arg4[%c0_6, %c0_7] : memref<32x16xbf16, #tpu.memory_space<vmem>>, vector<32x16xbf16>
    %cst_8 = arith.constant dense<0.000000e+00> : vector<256x16xf32>
    %11 = tpu.matmul %9, %10, %cst_8 {dimension_numbers = #tpu.dot_dimension_numbers<[1], [0], [0], [1], [0, 0, 1, 1], [], []>} : vector<256x32xbf16>, vector<32x16xbf16>, vector<256x16xf32> -> vector<256x16xf32>
    %c0_9 = arith.constant 0 : index
    %c0_10 = arith.constant 0 : index
    %12 = vector.load %arg5[%c0_9, %c0_10] : memref<1x16xf32, #tpu.memory_space<vmem>>, vector<1x16xf32>
    %13 = vector.broadcast %12 : vector<1x16xf32> to vector<256x16xf32>
    %14 = arith.addf %11, %13 : vector<256x16xf32>
    %cst_11 = arith.constant 0.000000e+00 : f32
    %15 = vector.broadcast %cst_11 : f32 to vector<256x16xf32>
    %16 = arith.maximumf %14, %15 : vector<256x16xf32>
    %17 = arith.truncf %16 : vector<256x16xf32> to vector<256x16xbf16>
    %c0_12 = arith.constant 0 : index
    %c0_13 = arith.constant 0 : index
    %18 = vector.load %arg6[%c0_12, %c0_13] : memref<16x128xbf16, #tpu.memory_space<vmem>>, vector<16x128xbf16>
    %cst_14 = arith.constant dense<0.000000e+00> : vector<256x128xf32>
    %19 = tpu.matmul %17, %18, %cst_14 {dimension_numbers = #tpu.dot_dimension_numbers<[1], [0], [0], [1], [0, 0, 1, 1], [], []>} : vector<256x16xbf16>, vector<16x128xbf16>, vector<256x128xf32> -> vector<256x128xf32>
    %c0_15 = arith.constant 0 : index
    %c0_16 = arith.constant 0 : index
    %20 = vector.load %arg7[%c0_15, %c0_16] : memref<1x128xf32, #tpu.memory_space<vmem>>, vector<1x128xf32>
    %21 = vector.broadcast %20 : vector<1x128xf32> to vector<256x128xf32>
    %22 = arith.addf %19, %21 : vector<256x128xf32>
    %c0_17 = arith.constant 0 : index
    %c0_18 = arith.constant 0 : index
    %23 = vector.load %arg15[%c0_17, %c0_18] : memref<256x128xf32, #tpu.memory_space<vmem>>, vector<256x128xf32>
    tpu.vector_store %arg15[%c0_17, %c0_18], %22 {strides = array<i32>} : memref<256x128xf32, #tpu.memory_space<vmem>>, vector<256x128xf32>,
    %24 = arith.truncf %22 : vector<256x128xf32> to vector<256x128xbf16>
    %c0_19 = arith.constant 0 : index
    %c0_20 = arith.constant 0 : index
    %25 = vector.load %arg8[%c0_19, %c0_20] : memref<128x16xbf16, #tpu.memory_space<vmem>>, vector<128x16xbf16>
    %cst_21 = arith.constant dense<0.000000e+00> : vector<256x16xf32>
    %26 = tpu.matmul %24, %25, %cst_21 {dimension_numbers = #tpu.dot_dimension_numbers<[1], [0], [0], [1], [0, 0, 1, 1], [], []>} : vector<256x128xbf16>, vector<128x16xbf16>, vector<256x16xf32> -> vector<256x16xf32>
    %c0_22 = arith.constant 0 : index
    %c0_23 = arith.constant 0 : index
    %27 = vector.load %arg9[%c0_22, %c0_23] : memref<1x16xf32, #tpu.memory_space<vmem>>, vector<1x16xf32>
    %28 = vector.broadcast %27 : vector<1x16xf32> to vector<256x16xf32>
    %29 = arith.addf %26, %28 : vector<256x16xf32>
    %cst_24 = arith.constant 0.000000e+00 : f32
    %30 = vector.broadcast %cst_24 : f32 to vector<256x16xf32>
    %31 = arith.maximumf %29, %30 : vector<256x16xf32>
    %32 = arith.truncf %31 : vector<256x16xf32> to vector<256x16xbf16>
    %c0_25 = arith.constant 0 : index
    %c0_26 = arith.constant 0 : index
    %33 = vector.load %arg10[%c0_25, %c0_26] : memref<16x32xbf16, #tpu.memory_space<vmem>>, vector<16x32xbf16>
    %cst_27 = arith.constant dense<0.000000e+00> : vector<256x32xf32>
    %34 = tpu.matmul %32, %33, %cst_27 {dimension_numbers = #tpu.dot_dimension_numbers<[1], [0], [0], [1], [0, 0, 1, 1], [], []>} : vector<256x16xbf16>, vector<16x32xbf16>, vector<256x32xf32> -> vector<256x32xf32>
    %c0_28 = arith.constant 0 : index
    %c0_29 = arith.constant 0 : index
    %35 = vector.load %arg11[%c0_28, %c0_29] : memref<1x32xf32, #tpu.memory_space<vmem>>, vector<1x32xf32>
    %36 = vector.broadcast %35 : vector<1x32xf32> to vector<256x32xf32>
    %37 = arith.addf %34, %36 : vector<256x32xf32>
    %cst_30 = arith.constant 0.000000e+00 : f32
    %38 = vector.broadcast %cst_30 : f32 to vector<256x32xf32>
    %39 = arith.maximumf %37, %38 : vector<256x32xf32>
    %40 = arith.truncf %39 : vector<256x32xf32> to vector<256x32xbf16>
    %c0_31 = arith.constant 0 : index
    %c0_32 = arith.constant 0 : index
    %41 = vector.load %arg12[%c0_31, %c0_32] : memref<32x32xbf16, #tpu.memory_space<vmem>>, vector<32x32xbf16>
    %cst_33 = arith.constant dense<0.000000e+00> : vector<256x32xf32>
    %42 = tpu.matmul %40, %41, %cst_33 {dimension_numbers = #tpu.dot_dimension_numbers<[1], [0], [0], [1], [0, 0, 1, 1], [], []>} : vector<256x32xbf16>, vector<32x32xbf16>, vector<256x32xf32> -> vector<256x32xf32>
    %c0_34 = arith.constant 0 : index
    %c0_35 = arith.constant 0 : index
    %43 = vector.load %arg13[%c0_34, %c0_35] : memref<1x32xf32, #tpu.memory_space<vmem>>, vector<1x32xf32>
    %44 = vector.broadcast %43 : vector<1x32xf32> to vector<256x32xf32>
    %45 = arith.addf %42, %44 : vector<256x32xf32>
    %c0_36 = arith.constant 0 : index
    %c0_37 = arith.constant 0 : index
    %46 = vector.load %arg14[%c0_36, %c0_37] : memref<256x32xf32, #tpu.memory_space<vmem>>, vector<256x32xf32>
    tpu.vector_store %arg14[%c0_36, %c0_37], %45 {strides = array<i32>} : memref<256x32xf32, #tpu.memory_space<vmem>>, vector<256x32xf32>,
    return
  }
  func.func @transform_0(%arg0: i32) -> (i32, i32) {
    %c0_i32 = arith.constant 0 : i32
    %c0_i32_0 = arith.constant 0 : i32
    return %arg0, %c0_i32 : i32, i32
  }
  func.func @transform_1(%arg0: i32) -> (i32, i32) {
    %c0_i32 = arith.constant 0 : i32
    %c0_i32_0 = arith.constant 0 : i32
    %c0_i32_1 = arith.constant 0 : i32
    return %c0_i32, %c0_i32_0 : i32, i32
  }
  func.func @transform_2(%arg0: i32) -> (i32, i32) {
    %c0_i32 = arith.constant 0 : i32
    %c0_i32_0 = arith.constant 0 : i32
    %c0_i32_1 = arith.constant 0 : i32
    return %c0_i32, %c0_i32_0 : i32, i32
  }
  func.func @transform_3(%arg0: i32) -> (i32, i32) {
    %c0_i32 = arith.constant 0 : i32
    %c0_i32_0 = arith.constant 0 : i32
    %c0_i32_1 = arith.constant 0 : i32
    return %c0_i32, %c0_i32_0 : i32, i32
  }
  func.func @transform_4(%arg0: i32) -> (i32, i32) {
    %c0_i32 = arith.constant 0 : i32
    %c0_i32_0 = arith.constant 0 : i32
    %c0_i32_1 = arith.constant 0 : i32
    return %c0_i32, %c0_i32_0 : i32, i32
  }
  func.func @transform_5(%arg0: i32) -> (i32, i32) {
    %c0_i32 = arith.constant 0 : i32
    %c0_i32_0 = arith.constant 0 : i32
    %c0_i32_1 = arith.constant 0 : i32
    return %c0_i32, %c0_i32_0 : i32, i32
  }
  func.func @transform_6(%arg0: i32) -> (i32, i32) {
    %c0_i32 = arith.constant 0 : i32
    %c0_i32_0 = arith.constant 0 : i32
    %c0_i32_1 = arith.constant 0 : i32
    return %c0_i32, %c0_i32_0 : i32, i32
  }
  func.func @transform_7(%arg0: i32) -> (i32, i32) {
    %c0_i32 = arith.constant 0 : i32
    %c0_i32_0 = arith.constant 0 : i32
    %c0_i32_1 = arith.constant 0 : i32
    return %c0_i32, %c0_i32_0 : i32, i32
  }
  func.func @transform_8(%arg0: i32) -> (i32, i32) {
    %c0_i32 = arith.constant 0 : i32
    %c0_i32_0 = arith.constant 0 : i32
    %c0_i32_1 = arith.constant 0 : i32
    return %c0_i32, %c0_i32_0 : i32, i32
  }
  func.func @transform_9(%arg0: i32) -> (i32, i32) {
    %c0_i32 = arith.constant 0 : i32
    %c0_i32_0 = arith.constant 0 : i32
    %c0_i32_1 = arith.constant 0 : i32
    return %c0_i32, %c0_i32_0 : i32, i32
  }
  func.func @transform_10(%arg0: i32) -> (i32, i32) {
    %c0_i32 = arith.constant 0 : i32
    %c0_i32_0 = arith.constant 0 : i32
    %c0_i32_1 = arith.constant 0 : i32
    return %c0_i32, %c0_i32_0 : i32, i32
  }
  func.func @transform_11(%arg0: i32) -> (i32, i32) {
    %c0_i32 = arith.constant 0 : i32
    %c0_i32_0 = arith.constant 0 : i32
    %c0_i32_1 = arith.constant 0 : i32
    return %c0_i32, %c0_i32_0 : i32, i32
  }
  func.func @transform_12(%arg0: i32) -> (i32, i32) {
    %c0_i32 = arith.constant 0 : i32
    %c0_i32_0 = arith.constant 0 : i32
    %c0_i32_1 = arith.constant 0 : i32
    return %c0_i32, %c0_i32_0 : i32, i32
  }
  func.func @transform_13(%arg0: i32) -> (i32, i32) {
    %c0_i32 = arith.constant 0 : i32
    %c0_i32_0 = arith.constant 0 : i32
    return %arg0, %c0_i32 : i32, i32
  }
  func.func @transform_14(%arg0: i32) -> (i32, i32) {
    %c0_i32 = arith.constant 0 : i32
    %c0_i32_0 = arith.constant 0 : i32
    return %arg0, %c0_i32 : i32, i32
  }
}

</mosaic_0001>

<llo_original>
// kernel: anomaly_detector_forward.1
$region0: #{anomaly_detector_forward.1}
  #allocation0 [shape = 'u32[]', space=smem, size = 0x4, offset = 0x4, fixed_abs, tag = 'smem constant byte address 0x4 - core index']
  #allocation1 [shape = 'u32[72,128]{1,0:T(1,128)}', space=vmem, size = 0x9000, scoped, tag = 'internal scratch']
  %s0 = inlined_call_operand.vmem [shape: f32[512,32], index: 0, kind: input, shape index: {}]
  %s1 = inlined_call_operand.vmem [shape: bf16[32,32], index: 1, kind: input, shape index: {}]
  %s2 = inlined_call_operand.vmem [shape: f32[1,32], index: 2, kind: input, shape index: {}]
  %s3 = inlined_call_operand.vmem [shape: bf16[32,16], index: 3, kind: input, shape index: {}]
  %s4 = inlined_call_operand.vmem [shape: f32[1,16], index: 4, kind: input, shape index: {}]
  %s5 = inlined_call_operand.vmem [shape: bf16[16,128], index: 5, kind: input, shape index: {}]
  %s6 = inlined_call_operand.vmem [shape: f32[1,128], index: 6, kind: input, shape index: {}]
  %s7 = inlined_call_operand.vmem [shape: bf16[128,16], index: 7, kind: input, shape index: {}]
  %s8 = inlined_call_operand.vmem [shape: f32[1,16], index: 8, kind: input, shape index: {}]
  %s9 = inlined_call_operand.vmem [shape: bf16[16,32], index: 9, kind: input, shape index: {}]
  %s10 = inlined_call_operand.vmem [shape: f32[1,32], index: 10, kind: input, shape index: {}]
  %s11 = inlined_call_operand.vmem [shape: bf16[32,32], index: 11, kind: input, shape index: {}]
  %s12 = inlined_call_operand.vmem [shape: f32[1,32], index: 12, kind: input, shape index: {}]
  %s13 = inlined_call_operand.vmem [shape: f32[512,32], index: 13, kind: output, shape index: {0}]
  %s14 = inlined_call_operand.vmem [shape: f32[512,128], index: 14, kind: output, shape index: {1}]
  %15 = xla_tuple %s13, %s14
  %s16 = sld [smem:[#allocation0]]
  $region93: #{anomaly_detector_forward.1} parent=0
    _
  %s18 = ssub.s32 1, %s16
  %s19 = scalar_select 0, %s18, %s16
  loop: start=0, step=1, limit=4
  $region2: #{anomaly_detector_forward.1} parent=0 // loop_pre_header
    _
  $region3: #{anomaly_detector_forward.1} parent=0 // loop_header
    %s21 = sphi 0, %s25
    %p22 = scmp.ge.s32.totalorder %s21, 4
    %s31 = sphi 0, %s33
    %s34 = sphi 0, %s31
    %s35 = sphi 0, %s34
    %s51 = sphi 0, %s35
    %s55 = sphi 0, %s55
    %s57 = sphi 0, %s55
    %s58 = sphi 0, %s57
    %s72 = sphi 0, %s58
    %s76 = sphi 0, %s76
    %s78 = sphi 0, %s76
    %s79 = sphi 0, %s78
    %s93 = sphi 0, %s79
    %s97 = sphi 0, %s97
    %s99 = sphi 0, %s97
    %s100 = sphi 0, %s99
    %s114 = sphi 0, %s100
    %s118 = sphi 0, %s118
    %s120 = sphi 0, %s118
    %s121 = sphi 0, %s120
    %s135 = sphi 0, %s121
    %s139 = sphi 0, %s139
    %s141 = sphi 0, %s139
    %s142 = sphi 0, %s141
    %s156 = sphi 0, %s142
    %s160 = sphi 0, %s160
    %s162 = sphi 0, %s160
    %s163 = sphi 0, %s162
    %s177 = sphi 0, %s163
    %s181 = sphi 0, %s181
    %s183 = sphi 0, %s181
    %s184 = sphi 0, %s183
    %s198 = sphi 0, %s184
    %s202 = sphi 0, %s202
    %s204 = sphi 0, %s202
    %s205 = sphi 0, %s204
    %s219 = sphi 0, %s205
    %s223 = sphi 0, %s223
    %s225 = sphi 0, %s223
    %s226 = sphi 0, %s225
    %s240 = sphi 0, %s226
    %s244 = sphi 0, %s244
    %s246 = sphi 0, %s244
    %s247 = sphi 0, %s246
    %s261 = sphi 0, %s247
    %s265 = sphi 0, %s265
    %s267 = sphi 0, %s265
    %s268 = sphi 0, %s267
    %s282 = sphi 0, %s268
    %s286 = sphi 0, %s286
    %s288 = sphi 0, %s286
    %s289 = sphi 0, %s288
    %s303 = sphi 0, %s289
    %s309 = sphi 0, %s311
    %s312 = sphi 0, %s309
    %s313 = sphi 0, %s312
    %s329 = sphi 0, %s313
    %s335 = sphi 0, %s337
    %s338 = sphi 0, %s335
    %s339 = sphi 0, %s338
    %s355 = sphi 0, %s339
  $region4: #{anomaly_detector_forward.1} parent=0 // loop_header_branch
    %24 = sbr.rel (%p22) target = $region8
  $region5: #{anomaly_detector_forward.1} parent=0 // loop_body
    %s26 = ssub.s32 %s21, 1
    %s27 = ssub.s32 %s21, 2
    %s28 = sadd.s32 %s21, 1
    %s29 = ssub.s32 %s21, %s28
    %p30 = scmp.eq.s32.totalorder %s29, 0
    %s32 = sadd.s32 %s31, 1
    %s33 = scalar_select %p30, %s31, %s32
    %p36 = pneg %p30
    %p37 = scmp.eq.s32.totalorder %s21, 1
    %p38 = por %p36, %p37
    %p39 = scmp.ne.s32.totalorder %s31, %s34
    %p40 = scmp.eq.s32.totalorder %s21, 0
    %p41 = por %p39, %p40
    %p42 = scmp.ne.s32.totalorder %s31, %s34
    %p43 = scmp.eq.s32.totalorder %s26, 1
    %p44 = por %p42, %p43
    %p45 = scmp.ne.s32.totalorder %s34, %s35
    %p46 = scmp.eq.s32.totalorder %s26, 0
    %p47 = por %p45, %p46
    %p48 = scmp.ne.s32.totalorder %s34, %s35
    %p49 = scmp.eq.s32.totalorder %s27, 1
    %p50 = por %p48, %p49
    %p52 = scmp.ne.s32.totalorder %s35, %s51
    %p53 = scmp.eq.s32.totalorder %s27, 0
    %p54 = por %p52, %p53
    %s56 = sadd.s32 %s55, 1
    %p59 = scmp.eq.s32.totalorder %s21, 1
    %p60 = scmp.ne.s32.totalorder %s55, %s57
    %p61 = scmp.eq.s32.totalorder %s21, 0
    %p62 = por %p60, %p61
    %p63 = scmp.ne.s32.totalorder %s55, %s57
    %p64 = scmp.eq.s32.totalorder %s26, 1
    %p65 = por %p63, %p64
    %p66 = scmp.ne.s32.totalorder %s57, %s58
    %p67 = scmp.eq.s32.totalorder %s26, 0
    %p68 = por %p66, %p67
    %p69 = scmp.ne.s32.totalorder %s57, %s58
    %p70 = scmp.eq.s32.totalorder %s27, 1
    %p71 = por %p69, %p70
    %p73 = scmp.ne.s32.totalorder %s58, %s72
    %p74 = scmp.eq.s32.totalorder %s27, 0
    %p75 = por %p73, %p74
    %s77 = sadd.s32 %s76, 1
    %p80 = scmp.eq.s32.totalorder %s21, 1
    %p81 = scmp.ne.s32.totalorder %s76, %s78
    %p82 = scmp.eq.s32.totalorder %s21, 0
    %p83 = por %p81, %p82
    %p84 = scmp.ne.s32.totalorder %s76, %s78
    %p85 = scmp.eq.s32.totalorder %s26, 1
    %p86 = por %p84, %p85
    %p87 = scmp.ne.s32.totalorder %s78, %s79
    %p88 = scmp.eq.s32.totalorder %s26, 0
    %p89 = por %p87, %p88
    %p90 = scmp.ne.s32.totalorder %s78, %s79
    %p91 = scmp.eq.s32.totalorder %s27, 1
    %p92 = por %p90, %p91
    %p94 = scmp.ne.s32.totalorder %s79, %s93
    %p95 = scmp.eq.s32.totalorder %s27, 0
    %p96 = por %p94, %p95
    %s98 = sadd.s32 %s97, 1
    %p101 = scmp.eq.s32.totalorder %s21, 1
    %p102 = scmp.ne.s32.totalorder %s97, %s99
    %p103 = scmp.eq.s32.totalorder %s21, 0
    %p104 = por %p102, %p103
    %p105 = scmp.ne.s32.totalorder %s97, %s99
    %p106 = scmp.eq.s32.totalorder %s26, 1
    %p107 = por %p105, %p106
    %p108 = scmp.ne.s32.totalorder %s99, %s100
    %p109 = scmp.eq.s32.totalorder %s26, 0
    %p110 = por %p108, %p109
    %p111 = scmp.ne.s32.totalorder %s99, %s100
    %p112 = scmp.eq.s32.totalorder %s27, 1
    %p113 = por %p111, %p112
    %p115 = scmp.ne.s32.totalorder %s100, %s114
    %p116 = scmp.eq.s32.totalorder %s27, 0
    %p117 = por %p115, %p116
    %s119 = sadd.s32 %s118, 1
    %p122 = scmp.eq.s32.totalorder %s21, 1
    %p123 = scmp.ne.s32.totalorder %s118, %s120
    %p124 = scmp.eq.s32.totalorder %s21, 0
    %p125 = por %p123, %p124
    %p126 = scmp.ne.s32.totalorder %s118, %s120
    %p127 = scmp.eq.s32.totalorder %s26, 1
    %p128 = por %p126, %p127
    %p129 = scmp.ne.s32.totalorder %s120, %s121
    %p130 = scmp.eq.s32.totalorder %s26, 0
    %p131 = por %p129, %p130
    %p132 = scmp.ne.s32.totalorder %s120, %s121
    %p133 = scmp.eq.s32.totalorder %s27, 1
    %p134 = por %p132, %p133
    %p136 = scmp.ne.s32.totalorder %s121, %s135
    %p137 = scmp.eq.s32.totalorder %s27, 0
    %p138 = por %p136, %p137
    %s140 = sadd.s32 %s139, 1
    %p143 = scmp.eq.s32.totalorder %s21, 1
    %p144 = scmp.ne.s32.totalorder %s139, %s141
    %p145 = scmp.eq.s32.totalorder %s21, 0
    %p146 = por %p144, %p145
    %p147 = scmp.ne.s32.totalorder %s139, %s141
    %p148 = scmp.eq.s32.totalorder %s26, 1
    %p149 = por %p147, %p148
    %p150 = scmp.ne.s32.totalorder %s141, %s142
    %p151 = scmp.eq.s32.totalorder %s26, 0
    %p152 = por %p150, %p151
    %p153 = scmp.ne.s32.totalorder %s141, %s142
    %p154 = scmp.eq.s32.totalorder %s27, 1
    %p155 = por %p153, %p154
    %p157 = scmp.ne.s32.totalorder %s142, %s156
    %p158 = scmp.eq.s32.totalorder %s27, 0
    %p159 = por %p157, %p158
    %s161 = sadd.s32 %s160, 1
    %p164 = scmp.eq.s32.totalorder %s21, 1
    %p165 = scmp.ne.s32.totalorder %s160, %s162
    %p166 = scmp.eq.s32.totalorder %s21, 0
    %p167 = por %p165, %p166
    %p168 = scmp.ne.s32.totalorder %s160, %s162
    %p169 = scmp.eq.s32.totalorder %s26, 1
    %p170 = por %p168, %p169
    %p171 = scmp.ne.s32.totalorder %s162, %s163
    %p172 = scmp.eq.s32.totalorder %s26, 0
    %p173 = por %p171, %p172
    %p174 = scmp.ne.s32.totalorder %s162, %s163
    %p175 = scmp.eq.s32.totalorder %s27, 1
    %p176 = por %p174, %p175
    %p178 = scmp.ne.s32.totalorder %s163, %s177
    %p179 = scmp.eq.s32.totalorder %s27, 0
    %p180 = por %p178, %p179
    %s182 = sadd.s32 %s181, 1
    %p185 = scmp.eq.s32.totalorder %s21, 1
    %p186 = scmp.ne.s32.totalorder %s181, %s183
    %p187 = scmp.eq.s32.totalorder %s21, 0
    %p188 = por %p186, %p187
    %p189 = scmp.ne.s32.totalorder %s181, %s183
    %p190 = scmp.eq.s32.totalorder %s26, 1
    %p191 = por %p189, %p190
    %p192 = scmp.ne.s32.totalorder %s183, %s184
    %p193 = scmp.eq.s32.totalorder %s26, 0
    %p194 = por %p192, %p193
    %p195 = scmp.ne.s32.totalorder %s183, %s184
    %p196 = scmp.eq.s32.totalorder %s27, 1
    %p197 = por %p195, %p196
    %p199 = scmp.ne.s32.totalorder %s184, %s198
    %p200 = scmp.eq.s32.totalorder %s27, 0
    %p201 = por %p199, %p200
    %s203 = sadd.s32 %s202, 1
    %p206 = scmp.eq.s32.totalorder %s21, 1
    %p207 = scmp.ne.s32.totalorder %s202, %s204
    %p208 = scmp.eq.s32.totalorder %s21, 0
    %p209 = por %p207, %p208
    %p210 = scmp.ne.s32.totalorder %s202, %s204
    %p211 = scmp.eq.s32.totalorder %s26, 1
    %p212 = por %p210, %p211
    %p213 = scmp.ne.s32.totalorder %s204, %s205
    %p214 = scmp.eq.s32.totalorder %s26, 0
    %p215 = por %p213, %p214
    %p216 = scmp.ne.s32.totalorder %s204, %s205
    %p217 = scmp.eq.s32.totalorder %s27, 1
    %p218 = por %p216, %p217
    %p220 = scmp.ne.s32.totalorder %s205, %s219
    %p221 = scmp.eq.s32.totalorder %s27, 0
    %p222 = por %p220, %p221
    %s224 = sadd.s32 %s223, 1
    %p227 = scmp.eq.s32.totalorder %s21, 1
    %p228 = scmp.ne.s32.totalorder %s223, %s225
    %p229 = scmp.eq.s32.totalorder %s21, 0
    %p230 = por %p228, %p229
    %p231 = scmp.ne.s32.totalorder %s223, %s225
    %p232 = scmp.eq.s32.totalorder %s26, 1
    %p233 = por %p231, %p232
    %p234 = scmp.ne.s32.totalorder %s225, %s226
    %p235 = scmp.eq.s32.totalorder %s26, 0
    %p236 = por %p234, %p235
    %p237 = scmp.ne.s32.totalorder %s225, %s226
    %p238 = scmp.eq.s32.totalorder %s27, 1
    %p239 = por %p237, %p238
    %p241 = scmp.ne.s32.totalorder %s226, %s240
    %p242 = scmp.eq.s32.totalorder %s27, 0
    %p243 = por %p241, %p242
    %s245 = sadd.s32 %s244, 1
    %p248 = scmp.eq.s32.totalorder %s21, 1
    %p249 = scmp.ne.s32.totalorder %s244, %s246
    %p250 = scmp.eq.s32.totalorder %s21, 0
    %p251 = por %p249, %p250
    %p252 = scmp.ne.s32.totalorder %s244, %s246
    %p253 = scmp.eq.s32.totalorder %s26, 1
    %p254 = por %p252, %p253
    %p255 = scmp.ne.s32.totalorder %s246, %s247
    %p256 = scmp.eq.s32.totalorder %s26, 0
    %p257 = por %p255, %p256
    %p258 = scmp.ne.s32.totalorder %s246, %s247
    %p259 = scmp.eq.s32.totalorder %s27, 1
    %p260 = por %p258, %p259
    %p262 = scmp.ne.s32.totalorder %s247, %s261
    %p263 = scmp.eq.s32.totalorder %s27, 0
    %p264 = por %p262, %p263
    %s266 = sadd.s32 %s265, 1
    %p269 = scmp.eq.s32.totalorder %s21, 1
    %p270 = scmp.ne.s32.totalorder %s265, %s267
    %p271 = scmp.eq.s32.totalorder %s21, 0
    %p272 = por %p270, %p271
    %p273 = scmp.ne.s32.totalorder %s265, %s267
    %p274 = scmp.eq.s32.totalorder %s26, 1
    %p275 = por %p273, %p274
    %p276 = scmp.ne.s32.totalorder %s267, %s268
    %p277 = scmp.eq.s32.totalorder %s26, 0
    %p278 = por %p276, %p277
    %p279 = scmp.ne.s32.totalorder %s267, %s268
    %p280 = scmp.eq.s32.totalorder %s27, 1
    %p281 = por %p279, %p280
    %p283 = scmp.ne.s32.totalorder %s268, %s282
    %p284 = scmp.eq.s32.totalorder %s27, 0
    %p285 = por %p283, %p284
    %s287 = sadd.s32 %s286, 1
    %p290 = scmp.eq.s32.totalorder %s21, 1
    %p291 = scmp.ne.s32.totalorder %s286, %s288
    %p292 = scmp.eq.s32.totalorder %s21, 0
    %p293 = por %p291, %p292
    %p294 = scmp.ne.s32.totalorder %s286, %s288
    %p295 = scmp.eq.s32.totalorder %s26, 1
    %p296 = por %p294, %p295
    %p297 = scmp.ne.s32.totalorder %s288, %s289
    %p298 = scmp.eq.s32.totalorder %s26, 0
    %p299 = por %p297, %p298
    %p300 = scmp.ne.s32.totalorder %s288, %s289
    %p301 = scmp.eq.s32.totalorder %s27, 1
    %p302 = por %p300, %p301
    %p304 = scmp.ne.s32.totalorder %s289, %s303
    %p305 = scmp.eq.s32.totalorder %s27, 0
    %p306 = por %p304, %p305
    %s307 = ssub.s32 %s21, %s28
    %p308 = scmp.eq.s32.totalorder %s307, 0
    %s310 = sadd.s32 %s309, 1
    %s311 = scalar_select %p308, %s309, %s310
    %p314 = pneg %p308
    %p315 = scmp.eq.s32.totalorder %s21, 1
    %p316 = por %p314, %p315
    %p317 = scmp.ne.s32.totalorder %s309, %s312
    %p318 = scmp.eq.s32.totalorder %s21, 0
    %p319 = por %p317, %p318
    %p320 = scmp.ne.s32.totalorder %s309, %s312
    %p321 = scmp.eq.s32.totalorder %s26, 1
    %p322 = por %p320, %p321
    %p323 = scmp.ne.s32.totalorder %s312, %s313
    %p324 = scmp.eq.s32.totalorder %s26, 0
    %p325 = por %p323, %p324
    %p326 = scmp.ne.s32.totalorder %s312, %s313
    %p327 = scmp.eq.s32.totalorder %s27, 1
    %p328 = por %p326, %p327
    %p330 = scmp.ne.s32.totalorder %s313, %s329
    %p331 = scmp.eq.s32.totalorder %s27, 0
    %p332 = por %p330, %p331
    %s333 = ssub.s32 %s21, %s28
    %p334 = scmp.eq.s32.totalorder %s333, 0
    %s336 = sadd.s32 %s335, 1
    %s337 = scalar_select %p334, %s335, %s336
    %p340 = pneg %p334
    %p341 = scmp.eq.s32.totalorder %s21, 1
    %p342 = por %p340, %p341
    %p343 = scmp.ne.s32.totalorder %s335, %s338
    %p344 = scmp.eq.s32.totalorder %s21, 0
    %p345 = por %p343, %p344
    %p346 = scmp.ne.s32.totalorder %s335, %s338
    %p347 = scmp.eq.s32.totalorder %s26, 1
    %p348 = por %p346, %p347
    %p349 = scmp.ne.s32.totalorder %s338, %s339
    %p350 = scmp.eq.s32.totalorder %s26, 0
    %p351 = por %p349, %p350
    %p352 = scmp.ne.s32.totalorder %s338, %s339
    %p353 = scmp.eq.s32.totalorder %s27, 1
    %p354 = por %p352, %p353
    %p356 = scmp.ne.s32.totalorder %s339, %s355
    %p357 = scmp.eq.s32.totalorder %s27, 0
    %p358 = por %p356, %p357
    %p359 = scmp.le.s32.totalorder 1, %s21
    %p360 = scmp.lt.s32.totalorder %s21, 3
    %p361 = pnand %p359, %p360
    %p362 = pneg %p361
    // Predicated region
    $region9: #{anomaly_detector_forward.1} parent=5 // pred_check
      _
    $region10: #{anomaly_detector_forward.1} parent=5 // pred_check_branch
      %364 = sbr.rel (%p361) target = $region12
    $region11: #{anomaly_detector_forward.1} parent=5 // pred_region
      %s365 = ssub.s32 %s21, 1
      // Predicated region
      $region13: #{anomaly_detector_forward.1} parent=11 // pred_check
        %p366 = pneg %p68
      $region14: #{anomaly_detector_forward.1} parent=11 // pred_check_branch
        %368 = sbr.rel (%p366) target = $region16
      $region15: #{anomaly_detector_forward.1} parent=11 // pred_region
        _
      $region16: #{anomaly_detector_forward.1} parent=11 // pred_fallthru
        _
      // Predicated region
      $region17: #{anomaly_detector_forward.1} parent=11 // pred_check
        %p369 = pneg %p89
      $region18: #{anomaly_detector_forward.1} parent=11 // pred_check_branch
        %371 = sbr.rel (%p369) target = $region20
      $region19: #{anomaly_detector_forward.1} parent=11 // pred_region
        _
      $region20: #{anomaly_detector_forward.1} parent=11 // pred_fallthru
        _
      // Predicated region
      $region21: #{anomaly_detector_forward.1} parent=11 // pred_check
        %p372 = pneg %p110
      $region22: #{anomaly_detector_forward.1} parent=11 // pred_check_branch
        %374 = sbr.rel (%p372) target = $region24
      $region23: #{anomaly_detector_forward.1} parent=11 // pred_region
        _
      $region24: #{anomaly_detector_forward.1} parent=11 // pred_fallthru
        _
      // Predicated region
      $region25: #{anomaly_detector_forward.1} parent=11 // pred_check
        %p375 = pneg %p131
      $region26: #{anomaly_detector_forward.1} parent=11 // pred_check_branch
        %377 = sbr.rel (%p375) target = $region28
      $region27: #{anomaly_detector_forward.1} parent=11 // pred_region
        _
      $region28: #{anomaly_detector_forward.1} parent=11 // pred_fallthru
        _
      // Predicated region
      $region29: #{anomaly_detector_forward.1} parent=11 // pred_check
        %p378 = pneg %p152
      $region30: #{anomaly_detector_forward.1} parent=11 // pred_check_branch
        %380 = sbr.rel (%p378) target = $region32
      $region31: #{anomaly_detector_forward.1} parent=11 // pred_region
        _
      $region32: #{anomaly_detector_forward.1} parent=11 // pred_fallthru
        _
      // Predicated region
      $region33: #{anomaly_detector_forward.1} parent=11 // pred_check
        %p381 = pneg %p173
      $region34: #{anomaly_detector_forward.1} parent=11 // pred_check_branch
        %383 = sbr.rel (%p381) target = $region36
      $region35: #{anomaly_detector_forward.1} parent=11 // pred_region
        _
      $region36: #{anomaly_detector_forward.1} parent=11 // pred_fallthru
        _
      // Predicated region
      $region37: #{anomaly_detector_forward.1} parent=11 // pred_check
        %p384 = pneg %p194
      $region38: #{anomaly_detector_forward.1} parent=11 // pred_check_branch
        %386 = sbr.rel (%p384) target = $region40
      $region39: #{anomaly_detector_forward.1} parent=11 // pred_region
        _
      $region40: #{anomaly_detector_forward.1} parent=11 // pred_fallthru
        _
      // Predicated region
      $region41: #{anomaly_detector_forward.1} parent=11 // pred_check
        %p387 = pneg %p215
      $region42: #{anomaly_detector_forward.1} parent=11 // pred_check_branch
        %389 = sbr.rel (%p387) target = $region44
      $region43: #{anomaly_detector_forward.1} parent=11 // pred_region
        _
      $region44: #{anomaly_detector_forward.1} parent=11 // pred_fallthru
        _
      // Predicated region
      $region45: #{anomaly_detector_forward.1} parent=11 // pred_check
        %p390 = pneg %p236
      $region46: #{anomaly_detector_forward.1} parent=11 // pred_check_branch
        %392 = sbr.rel (%p390) target = $region48
      $region47: #{anomaly_detector_forward.1} parent=11 // pred_region
        _
      $region48: #{anomaly_detector_forward.1} parent=11 // pred_fallthru
        _
      // Predicated region
      $region49: #{anomaly_detector_forward.1} parent=11 // pred_check
        %p393 = pneg %p257
      $region50: #{anomaly_detector_forward.1} parent=11 // pred_check_branch
        %395 = sbr.rel (%p393) target = $region52
      $region51: #{anomaly_detector_forward.1} parent=11 // pred_region
        _
      $region52: #{anomaly_detector_forward.1} parent=11 // pred_fallthru
        _
      // Predicated region
      $region53: #{anomaly_detector_forward.1} parent=11 // pred_check
        %p396 = pneg %p278
      $region54: #{anomaly_detector_forward.1} parent=11 // pred_check_branch
        %398 = sbr.rel (%p396) target = $region56
      $region55: #{anomaly_detector_forward.1} parent=11 // pred_region
        _
      $region56: #{anomaly_detector_forward.1} parent=11 // pred_fallthru
        _
      // Predicated region
      $region57: #{anomaly_detector_forward.1} parent=11 // pred_check
        %p399 = pneg %p299
      $region58: #{anomaly_detector_forward.1} parent=11 // pred_check_branch
        %401 = sbr.rel (%p399) target = $region60
      $region59: #{anomaly_detector_forward.1} parent=11 // pred_region
        _
      $region60: #{anomaly_detector_forward.1} parent=11 // pred_fallthru
        _
    $region12: #{anomaly_detector_forward.1} parent=5 // pred_fallthru
      _
    %p402 = scmp.lt.s32.totalorder %s21, 2
    // Predicated region
    $region61: #{anomaly_detector_forward.1} parent=5 // pred_check
      %p403 = pneg %p402
    $region62: #{anomaly_detector_forward.1} parent=5 // pred_check_branch
      %405 = sbr.rel (%p403) target = $region64
    $region63: #{anomaly_detector_forward.1} parent=5 // pred_region
      // Predicated region
      $region65: #{anomaly_detector_forward.1} parent=63 // pred_check
        %p406 = pneg %p41
      $region66: #{anomaly_detector_forward.1} parent=63 // pred_check_branch
        %408 = sbr.rel (%p406) target = $region68
      $region67: #{anomaly_detector_forward.1} parent=63 // pred_region
        %s409 = smul.u32 32, %s21
        %p410 = scmp.lt.s32.totalorder %s409, 63
        %s411 = scalar_select %p410, %s409, 63
        %s412 = smul.addr %s411, 8
        %s413 = scalar_lea.vmem %s0, %s412
        %s414 = smul.u32 32, %s21
      $region68: #{anomaly_detector_forward.1} parent=63 // pred_fallthru
        _
    $region64: #{anomaly_detector_forward.1} parent=5 // pred_fallthru
      _
    %p415 = scmp.le.s32.totalorder 1, %s21
    %p416 = scmp.lt.s32.totalorder %s21, 3
    %p417 = pnand %p415, %p416
    %p418 = pneg %p417
    // Predicated region
    $region69: #{anomaly_detector_forward.1} parent=5 // pred_check
      _
    $region70: #{anomaly_detector_forward.1} parent=5 // pred_check_branch
      %420 = sbr.rel (%p417) target = $region72
    $region71: #{anomaly_detector_forward.1} parent=5 // pred_region
      %s421 = ssub.s32 %s21, 1
      %s422 = smul.u32 32, %s26
      %p423 = scmp.lt.s32.totalorder %s422, 63
      %s424 = scalar_select %p423, %s422, 63
      %s425 = smul.addr %s424, 8
      %s426 = scalar_lea.vmem %s0, %s425
      %p427 = pneg %p47
      %p428 = pneg %p44
      %p429 = pneg %p68
      %p430 = pneg %p65
      %p431 = pneg %p89
      %p432 = pneg %p86
      %p433 = pneg %p110
      %p434 = pneg %p107
      %p435 = pneg %p131
      %p436 = pneg %p128
      %p437 = pneg %p152
      %p438 = pneg %p149
      %p439 = pneg %p173
      %p440 = pneg %p170
      %p441 = pneg %p194
      %p442 = pneg %p191
      %p443 = pneg %p215
      %p444 = pneg %p212
      %p445 = pneg %p236
      %p446 = pneg %p233
      %p447 = pneg %p257
      %p448 = pneg %p254
      %p449 = pneg %p278
      %p450 = pneg %p275
      %p451 = pneg %p299
      %p452 = pneg %p296
      %p453 = pneg %p325
      %p454 = pneg %p322
      %s455 = smul.u32 32, %s26
      %p456 = scmp.lt.s32.totalorder %s455, 63
      %s457 = scalar_select %p456, %s455, 63
      %s458 = smul.addr %s457, 8
      %s459 = scalar_lea.vmem %s13, %s458
      %p460 = pneg %p351
      %p461 = pneg %p348
      %s462 = smul.u32 32, %s26
      %p463 = scmp.lt.s32.totalorder %s462, 63
      %s464 = scalar_select %p463, %s462, 63
      %s465 = smul.addr %s464, 8
      %s466 = scalar_lea.vmem %s14, %s465
      %s467 = smul.u32 32, %s26
      %p468 = scmp.lt.s32.totalorder %s467, 63
      %s469 = scalar_select %p468, %s467, 63
      %s470 = smul.addr %s469, 8
      %s471 = scalar_lea.vmem %s0, %s470
      %s472 = smul.u32 32, %s26
      %s473 = smul.u32 32, %s26
      %p474 = scmp.lt.s32.totalorder %s473, 63
      %s475 = scalar_select %p474, %s473, 63
      %s476 = smul.addr %s475, 8
      %s477 = scalar_lea.vmem %s13, %s476
      %s478 = smul.u32 32, %s26
      %s479 = smul.u32 32, %s26
      %p480 = scmp.lt.s32.totalorder %s479, 63
      %s481 = scalar_select %p480, %s479, 63
      %s482 = smul.addr %s481, 8
      %s483 = scalar_lea.vmem %s14, %s482
      %s484 = smul.u32 32, %s26
      %v486 = vld [vmem:[%s471] sm:$0xff]
      %v487 = vld [vmem:[%s471 + $0x8] sm:$0xff]
      %v488 = vld [vmem:[%s471 + $0x10] sm:$0xff]
      %v489 = vld [vmem:[%s471 + $0x18] sm:$0xff]
      %v490 = vld [vmem:[%s471 + $0x20] sm:$0xff]
      %v491 = vld [vmem:[%s471 + $0x28] sm:$0xff]
      %v492 = vld [vmem:[%s471 + $0x30] sm:$0xff]
      %v493 = vld [vmem:[%s471 + $0x38] sm:$0xff]
      %v494 = vld [vmem:[%s471 + $0x40] sm:$0xff]
      %v495 = vld [vmem:[%s471 + $0x48] sm:$0xff]
      %v496 = vld [vmem:[%s471 + $0x50] sm:$0xff]
      %v497 = vld [vmem:[%s471 + $0x58] sm:$0xff]
      %v498 = vld [vmem:[%s471 + $0x60] sm:$0xff]
      %v499 = vld [vmem:[%s471 + $0x68] sm:$0xff]
      %v500 = vld [vmem:[%s471 + $0x70] sm:$0xff]
      %v501 = vld [vmem:[%s471 + $0x78] sm:$0xff]
      %v502 = vld [vmem:[%s471 + $0x80] sm:$0xff]
      %v503 = vld [vmem:[%s471 + $0x88] sm:$0xff]
      %v504 = vld [vmem:[%s471 + $0x90] sm:$0xff]
      %v505 = vld [vmem:[%s471 + $0x98] sm:$0xff]
      %v506 = vld [vmem:[%s471 + $0xa0] sm:$0xff]
      %v507 = vld [vmem:[%s471 + $0xa8] sm:$0xff]
      %v508 = vld [vmem:[%s471 + $0xb0] sm:$0xff]
      %v509 = vld [vmem:[%s471 + $0xb8] sm:$0xff]
      %v510 = vld [vmem:[%s471 + $0xc0] sm:$0xff]
      %v511 = vld [vmem:[%s471 + $0xc8] sm:$0xff]
      %v512 = vld [vmem:[%s471 + $0xd0] sm:$0xff]
      %v513 = vld [vmem:[%s471 + $0xd8] sm:$0xff]
      %v514 = vld [vmem:[%s471 + $0xe0] sm:$0xff]
      %v515 = vld [vmem:[%s471 + $0xe8] sm:$0xff]
      %v516 = vld [vmem:[%s471 + $0xf0] sm:$0xff]
      %v517 = vld [vmem:[%s471 + $0xf8] sm:$0xff]
      %v518 = vpack.c.bf16 %v487, %v486
      %v519 = vpack.c.bf16 %v489, %v488
      %v520 = vpack.c.bf16 %v491, %v490
      %v521 = vpack.c.bf16 %v493, %v492
      %v522 = vpack.c.bf16 %v495, %v494
      %v523 = vpack.c.bf16 %v497, %v496
      %v524 = vpack.c.bf16 %v499, %v498
      %v525 = vpack.c.bf16 %v501, %v500
      %v526 = vpack.c.bf16 %v503, %v502
      %v527 = vpack.c.bf16 %v505, %v504
      %v528 = vpack.c.bf16 %v507, %v506
      %v529 = vpack.c.bf16 %v509, %v508
      %v530 = vpack.c.bf16 %v511, %v510
      %v531 = vpack.c.bf16 %v513, %v512
      %v532 = vpack.c.bf16 %v515, %v514
      %v533 = vpack.c.bf16 %v517, %v516
      %v534 = vld [vmem:[%s1] sm:$0xf]
      %v535 = vld [vmem:[%s1 + $0x4] sm:$0xf]
      %v536 = vld [vmem:[%s1 + $0x8] sm:$0xf]
      %v537 = vld [vmem:[%s1 + $0xc] sm:$0xf]
      %v538 = vld [vmem:[%s2] sm:$0x1]
      %v540 = vperm.slane %v538, 0
      %v546 = vunpack.c.l.b16 %v534
      %v547 = vunpack.c.l.b16 %v535
      %v548 = vunpack.c.l.b16 %v536
      %v549 = vunpack.c.l.b16 %v537
      %v550 = vpack.c.b16 %v547, %v546
      %v551 = vpack.c.b16 %v549, %v548
      %vm554 = vcmask 261120
      %v556 = vsel %vm554, %v518, 0
      %v559 = vsel %vm554, %v519, 0
      %v562 = vsel %vm554, %v520, 0
      %v565 = vsel %vm554, %v521, 0
      %v568 = vsel %vm554, %v522, 0
      %v571 = vsel %vm554, %v523, 0
      %v574 = vsel %vm554, %v524, 0
      %v577 = vsel %vm554, %v525, 0
      %v580 = vsel %vm554, %v526, 0
      %v583 = vsel %vm554, %v527, 0
      %v586 = vsel %vm554, %v528, 0
      %v589 = vsel %vm554, %v529, 0
      %v592 = vsel %vm554, %v530, 0
      %v595 = vsel %vm554, %v531, 0
      %v598 = vsel %vm554, %v532, 0
      %v601 = vsel %vm554, %v533, 0
      %603 = vmatpush.bf16.msra.mxu0 0
      %604 = vmatpush.bf16.msra.mxu0 0
      %605 = vmatpush.bf16.msra.mxu0 0
      %606 = vmatpush.bf16.msra.mxu0 0
      %607 = vmatpush.bf16.msra.mxu0 0
      %608 = vmatpush.bf16.msra.mxu0 0
      %609 = vmatpush.bf16.msra.mxu0 %v551
      %610 = vmatpush.bf16.msra.mxu0 %v550
      %611 = vmatmul.bf16.gmra.mxu0 %v556
      %v612 = vpop.f32.mrf.mxu0
      %v613 = vadd.f32 %v540, %v612
      %v614 = vpop.f32.mrf.mxu0
      %v615 = vadd.f32 %v540, %v614
      %616 = vmatmul.bf16.gmra.mxu0 %v559
      %v617 = vpop.f32.mrf.mxu0
      %v618 = vadd.f32 %v540, %v617
      %v619 = vpop.f32.mrf.mxu0
      %v620 = vadd.f32 %v540, %v619
      %621 = vmatmul.bf16.gmra.mxu0 %v562
      %v622 = vpop.f32.mrf.mxu0
      %v623 = vadd.f32 %v540, %v622
      %v624 = vpop.f32.mrf.mxu0
      %v625 = vadd.f32 %v540, %v624
      %626 = vmatmul.bf16.gmra.mxu0 %v565
      %v627 = vpop.f32.mrf.mxu0
      %v628 = vadd.f32 %v540, %v627
      %v629 = vpop.f32.mrf.mxu0
      %v630 = vadd.f32 %v540, %v629
      %631 = vmatmul.bf16.gmra.mxu0 %v568
      %v632 = vpop.f32.mrf.mxu0
      %v633 = vadd.f32 %v540, %v632
      %v634 = vpop.f32.mrf.mxu0
      %v635 = vadd.f32 %v540, %v634
      %636 = vmatmul.bf16.gmra.mxu0 %v571
      %v637 = vpop.f32.mrf.mxu0
      %v638 = vadd.f32 %v540, %v637
      %v639 = vpop.f32.mrf.mxu0
      %v640 = vadd.f32 %v540, %v639
      %641 = vmatmul.bf16.gmra.mxu0 %v574
      %v642 = vpop.f32.mrf.mxu0
      %v643 = vadd.f32 %v540, %v642
      %v644 = vpop.f32.mrf.mxu0
      %v645 = vadd.f32 %v540, %v644
      %646 = vmatmul.bf16.gmra.mxu0 %v577
      %v647 = vpop.f32.mrf.mxu0
      %v648 = vadd.f32 %v540, %v647
      %v649 = vpop.f32.mrf.mxu0
      %v650 = vadd.f32 %v540, %v649
      %651 = vmatmul.bf16.gmra.mxu0 %v580
      %v652 = vpop.f32.mrf.mxu0
      %v653 = vadd.f32 %v540, %v652
      %v654 = vpop.f32.mrf.mxu0
      %v655 = vadd.f32 %v540, %v654
      %656 = vmatmul.bf16.gmra.mxu0 %v583
      %v657 = vpop.f32.mrf.mxu0
      %v658 = vadd.f32 %v540, %v657
      %v659 = vpop.f32.mrf.mxu0
      %v660 = vadd.f32 %v540, %v659
      %661 = vmatmul.bf16.gmra.mxu0 %v586
      %v662 = vpop.f32.mrf.mxu0
      %v663 = vadd.f32 %v540, %v662
      %v664 = vpop.f32.mrf.mxu0
      %v665 = vadd.f32 %v540, %v664
      %666 = vmatmul.bf16.gmra.mxu0 %v589
      %v667 = vpop.f32.mrf.mxu0
      %v668 = vadd.f32 %v540, %v667
      %v669 = vpop.f32.mrf.mxu0
      %v670 = vadd.f32 %v540, %v669
      %671 = vmatmul.bf16.gmra.mxu0 %v592
      %v672 = vpop.f32.mrf.mxu0
      %v673 = vadd.f32 %v540, %v672
      %v674 = vpop.f32.mrf.mxu0
      %v675 = vadd.f32 %v540, %v674
      %676 = vmatmul.bf16.gmra.mxu0 %v595
      %v677 = vpop.f32.mrf.mxu0
      %v678 = vadd.f32 %v540, %v677
      %v679 = vpop.f32.mrf.mxu0
      %v680 = vadd.f32 %v540, %v679
      %681 = vmatmul.bf16.gmra.mxu0 %v598
      %v682 = vpop.f32.mrf.mxu0
      %v683 = vadd.f32 %v540, %v682
      %v684 = vpop.f32.mrf.mxu0
      %v685 = vadd.f32 %v540, %v684
      %686 = vmatmul.bf16.gmra.mxu0 %v601
      %v687 = vpop.f32.mrf.mxu0
      %v688 = vadd.f32 %v540, %v687
      %v689 = vpop.f32.mrf.mxu0
      %v690 = vadd.f32 %v540, %v689
      %691 = vdwg.mxu0
      %v692 = vmax.f32 %v613, 0.0
      %v693 = vmax.f32 %v615, 0.0
      %v694 = vmax.f32 %v618, 0.0
      %v695 = vmax.f32 %v620, 0.0
      %v696 = vmax.f32 %v623, 0.0
      %v697 = vmax.f32 %v625, 0.0
      %v698 = vmax.f32 %v628, 0.0
      %v699 = vmax.f32 %v630, 0.0
      %v700 = vmax.f32 %v633, 0.0
      %v701 = vmax.f32 %v635, 0.0
      %v702 = vmax.f32 %v638, 0.0
      %v703 = vmax.f32 %v640, 0.0
      %v704 = vmax.f32 %v643, 0.0
      %v705 = vmax.f32 %v645, 0.0
      %v706 = vmax.f32 %v648, 0.0
      %v707 = vmax.f32 %v650, 0.0
      %v708 = vmax.f32 %v653, 0.0
      %v709 = vmax.f32 %v655, 0.0
      %v710 = vmax.f32 %v658, 0.0
      %v711 = vmax.f32 %v660, 0.0
      %v712 = vmax.f32 %v663, 0.0
      %v713 = vmax.f32 %v665, 0.0
      %v714 = vmax.f32 %v668, 0.0
      %v715 = vmax.f32 %v670, 0.0
      %v716 = vmax.f32 %v673, 0.0
      %v717 = vmax.f32 %v675, 0.0
      %v718 = vmax.f32 %v678, 0.0
      %v719 = vmax.f32 %v680, 0.0
      %v720 = vmax.f32 %v683, 0.0
      %v721 = vmax.f32 %v685, 0.0
      %v722 = vmax.f32 %v688, 0.0
      %v723 = vmax.f32 %v690, 0.0
      %v724 = vpack.c.bf16 %v693, %v692
      %v725 = vpack.c.bf16 %v695, %v694
      %v726 = vpack.c.bf16 %v697, %v696
      %v727 = vpack.c.bf16 %v699, %v698
      %v728 = vpack.c.bf16 %v701, %v700
      %v729 = vpack.c.bf16 %v703, %v702
      %v730 = vpack.c.bf16 %v705, %v704
      %v731 = vpack.c.bf16 %v707, %v706
      %v732 = vpack.c.bf16 %v709, %v708
      %v733 = vpack.c.bf16 %v711, %v710
      %v734 = vpack.c.bf16 %v713, %v712
      %v735 = vpack.c.bf16 %v715, %v714
      %v736 = vpack.c.bf16 %v717, %v716
      %v737 = vpack.c.bf16 %v719, %v718
      %v738 = vpack.c.bf16 %v721, %v720
      %v739 = vpack.c.bf16 %v723, %v722
      %v740 = vld [vmem:[%s3] sm:$0xf]
      %v741 = vld [vmem:[%s3 + $0x4] sm:$0xf]
      %v742 = vld [vmem:[%s3 + $0x8] sm:$0xf]
      %v743 = vld [vmem:[%s3 + $0xc] sm:$0xf]
      %v744 = vld [vmem:[%s4] sm:$0x1]
      %v746 = vperm.slane %v744, 0
      %v752 = vunpack.c.l.b16 %v740
      %v753 = vunpack.c.l.b16 %v741
      %v754 = vunpack.c.l.b16 %v742
      %v755 = vunpack.c.l.b16 %v743
      %v756 = vpack.c.b16 %v753, %v752
      %v757 = vpack.c.b16 %v755, %v754
      %v761 = vsel %vm554, %v724, 0
      %v764 = vsel %vm554, %v725, 0
      %v767 = vsel %vm554, %v726, 0
      %v770 = vsel %vm554, %v727, 0
      %v773 = vsel %vm554, %v728, 0
      %v776 = vsel %vm554, %v729, 0
      %v779 = vsel %vm554, %v730, 0
      %v782 = vsel %vm554, %v731, 0
      %v785 = vsel %vm554, %v732, 0
      %v788 = vsel %vm554, %v733, 0
      %v791 = vsel %vm554, %v734, 0
      %v794 = vsel %vm554, %v735, 0
      %v797 = vsel %vm554, %v736, 0
      %v800 = vsel %vm554, %v737, 0
      %v803 = vsel %vm554, %v738, 0
      %v806 = vsel %vm554, %v739, 0
      %808 = vmatpush.bf16.msra.mxu0 0
      %809 = vmatpush.bf16.msra.mxu0 0
      %810 = vmatpush.bf16.msra.mxu0 0
      %811 = vmatpush.bf16.msra.mxu0 0
      %812 = vmatpush.bf16.msra.mxu0 0
      %813 = vmatpush.bf16.msra.mxu0 0
      %814 = vmatpush.bf16.msra.mxu0 %v757
      %815 = vmatpush.bf16.msra.mxu0 %v756
      %816 = vmatmul.bf16.gmra.mxu0 %v761
      %v817 = vpop.f32.mrf.mxu0
      %v818 = vadd.f32 %v746, %v817
      %v819 = vpop.f32.mrf.mxu0
      %v820 = vadd.f32 %v746, %v819
      %821 = vmatmul.bf16.gmra.mxu0 %v764
      %v822 = vpop.f32.mrf.mxu0
      %v823 = vadd.f32 %v746, %v822
      %v824 = vpop.f32.mrf.mxu0
      %v825 = vadd.f32 %v746, %v824
      %826 = vmatmul.bf16.gmra.mxu0 %v767
      %v827 = vpop.f32.mrf.mxu0
      %v828 = vadd.f32 %v746, %v827
      %v829 = vpop.f32.mrf.mxu0
      %v830 = vadd.f32 %v746, %v829
      %831 = vmatmul.bf16.gmra.mxu0 %v770
      %v832 = vpop.f32.mrf.mxu0
      %v833 = vadd.f32 %v746, %v832
      %v834 = vpop.f32.mrf.mxu0
      %v835 = vadd.f32 %v746, %v834
      %836 = vmatmul.bf16.gmra.mxu0 %v773
      %v837 = vpop.f32.mrf.mxu0
      %v838 = vadd.f32 %v746, %v837
      %v839 = vpop.f32.mrf.mxu0
      %v840 = vadd.f32 %v746, %v839
      %841 = vmatmul.bf16.gmra.mxu0 %v776
      %v842 = vpop.f32.mrf.mxu0
      %v843 = vadd.f32 %v746, %v842
      %v844 = vpop.f32.mrf.mxu0
      %v845 = vadd.f32 %v746, %v844
      %846 = vmatmul.bf16.gmra.mxu0 %v779
      %v847 = vpop.f32.mrf.mxu0
      %v848 = vadd.f32 %v746, %v847
      %v849 = vpop.f32.mrf.mxu0
      %v850 = vadd.f32 %v746, %v849
      %851 = vmatmul.bf16.gmra.mxu0 %v782
      %v852 = vpop.f32.mrf.mxu0
      %v853 = vadd.f32 %v746, %v852
      %v854 = vpop.f32.mrf.mxu0
      %v855 = vadd.f32 %v746, %v854
      %856 = vmatmul.bf16.gmra.mxu0 %v785
      %v857 = vpop.f32.mrf.mxu0
      %v858 = vadd.f32 %v746, %v857
      %v859 = vpop.f32.mrf.mxu0
      %v860 = vadd.f32 %v746, %v859
      %861 = vmatmul.bf16.gmra.mxu0 %v788
      %v862 = vpop.f32.mrf.mxu0
      %v863 = vadd.f32 %v746, %v862
      %v864 = vpop.f32.mrf.mxu0
      %v865 = vadd.f32 %v746, %v864
      %866 = vmatmul.bf16.gmra.mxu0 %v791
      %v867 = vpop.f32.mrf.mxu0
      %v868 = vadd.f32 %v746, %v867
      %v869 = vpop.f32.mrf.mxu0
      %v870 = vadd.f32 %v746, %v869
      %871 = vmatmul.bf16.gmra.mxu0 %v794
      %v872 = vpop.f32.mrf.mxu0
      %v873 = vadd.f32 %v746, %v872
      %v874 = vpop.f32.mrf.mxu0
      %v875 = vadd.f32 %v746, %v874
      %876 = vmatmul.bf16.gmra.mxu0 %v797
      %v877 = vpop.f32.mrf.mxu0
      %v878 = vadd.f32 %v746, %v877
      %v879 = vpop.f32.mrf.mxu0
      %v880 = vadd.f32 %v746, %v879
      %881 = vmatmul.bf16.gmra.mxu0 %v800
      %v882 = vpop.f32.mrf.mxu0
      %v883 = vadd.f32 %v746, %v882
      %v884 = vpop.f32.mrf.mxu0
      %v885 = vadd.f32 %v746, %v884
      %886 = vmatmul.bf16.gmra.mxu0 %v803
      %v887 = vpop.f32.mrf.mxu0
      %v888 = vadd.f32 %v746, %v887
      %v889 = vpop.f32.mrf.mxu0
      %v890 = vadd.f32 %v746, %v889
      %891 = vmatmul.bf16.gmra.mxu0 %v806
      %v892 = vpop.f32.mrf.mxu0
      %v893 = vadd.f32 %v746, %v892
      %v894 = vpop.f32.mrf.mxu0
      %v895 = vadd.f32 %v746, %v894
      %896 = vdwg.mxu0
      %v897 = vmax.f32 %v818, 0.0
      %v898 = vmax.f32 %v820, 0.0
      %v899 = vmax.f32 %v823, 0.0
      %v900 = vmax.f32 %v825, 0.0
      %v901 = vmax.f32 %v828, 0.0
      %v902 = vmax.f32 %v830, 0.0
      %v903 = vmax.f32 %v833, 0.0
      %v904 = vmax.f32 %v835, 0.0
      %v905 = vmax.f32 %v838, 0.0
      %v906 = vmax.f32 %v840, 0.0
      %v907 = vmax.f32 %v843, 0.0
      %v908 = vmax.f32 %v845, 0.0
      %v909 = vmax.f32 %v848, 0.0
      %v910 = vmax.f32 %v850, 0.0
      %v911 = vmax.f32 %v853, 0.0
      %v912 = vmax.f32 %v855, 0.0
      %v913 = vmax.f32 %v858, 0.0
      %v914 = vmax.f32 %v860, 0.0
      %v915 = vmax.f32 %v863, 0.0
      %v916 = vmax.f32 %v865, 0.0
      %v917 = vmax.f32 %v868, 0.0
      %v918 = vmax.f32 %v870, 0.0
      %v919 = vmax.f32 %v873, 0.0
      %v920 = vmax.f32 %v875, 0.0
      %v921 = vmax.f32 %v878, 0.0
      %v922 = vmax.f32 %v880, 0.0
      %v923 = vmax.f32 %v883, 0.0
      %v924 = vmax.f32 %v885, 0.0
      %v925 = vmax.f32 %v888, 0.0
      %v926 = vmax.f32 %v890, 0.0
      %v927 = vmax.f32 %v893, 0.0
      %v928 = vmax.f32 %v895, 0.0
      %v929 = vpack.c.bf16 %v898, %v897
      %v930 = vpack.c.bf16 %v900, %v899
      %v931 = vpack.c.bf16 %v902, %v901
      %v932 = vpack.c.bf16 %v904, %v903
      %v933 = vpack.c.bf16 %v906, %v905
      %v934 = vpack.c.bf16 %v908, %v907
      %v935 = vpack.c.bf16 %v910, %v909
      %v936 = vpack.c.bf16 %v912, %v911
      %v937 = vpack.c.bf16 %v914, %v913
      %v938 = vpack.c.bf16 %v916, %v915
      %v939 = vpack.c.bf16 %v918, %v917
      %v940 = vpack.c.bf16 %v920, %v919
      %v941 = vpack.c.bf16 %v922, %v921
      %v942 = vpack.c.bf16 %v924, %v923
      %v943 = vpack.c.bf16 %v926, %v925
      %v944 = vpack.c.bf16 %v928, %v927
      %v945 = vld [vmem:[%s5] sm:$0xf]
      %v946 = vld [vmem:[%s5 + $0x4] sm:$0xf]
      %v947 = vld [vmem:[%s6] sm:$0x1]
      %v949 = vperm.slane %v947, 0
      %v953 = vunpack.c.l.b16 %v945
      %v954 = vunpack.c.l.b16 %v946
      %v955 = vpack.c.b16 %v954, %v953
      %vm957 = vcmask 130048
      %v959 = vsel %vm957, %v929, 0
      %v962 = vsel %vm957, %v930, 0
      %v965 = vsel %vm957, %v931, 0
      %v968 = vsel %vm957, %v932, 0
      %v971 = vsel %vm957, %v933, 0
      %v974 = vsel %vm957, %v934, 0
      %v977 = vsel %vm957, %v935, 0
      %v980 = vsel %vm957, %v936, 0
      %v983 = vsel %vm957, %v937, 0
      %v986 = vsel %vm957, %v938, 0
      %v989 = vsel %vm957, %v939, 0
      %v992 = vsel %vm957, %v940, 0
      %v995 = vsel %vm957, %v941, 0
      %v998 = vsel %vm957, %v942, 0
      %v1001 = vsel %vm957, %v943, 0
      %v1004 = vsel %vm957, %v944, 0
      %1006 = vmatpush.bf16.msra.mxu0 0
      %1007 = vmatpush.bf16.msra.mxu0 0
      %1008 = vmatpush.bf16.msra.mxu0 0
      %1009 = vmatpush.bf16.msra.mxu0 0
      %1010 = vmatpush.bf16.msra.mxu0 0
      %1011 = vmatpush.bf16.msra.mxu0 0
      %1012 = vmatpush.bf16.msra.mxu0 0
      %1013 = vmatpush.bf16.msra.mxu0 %v955
      %1014 = vmatmul.bf16.gmra.mxu0 %v959
      %v1015 = vpop.f32.mrf.mxu0
      %v1016 = vadd.f32 %v949, %v1015
      %v1017 = vpop.f32.mrf.mxu0
      %v1018 = vadd.f32 %v949, %v1017
      %1019 = vmatmul.bf16.gmra.mxu0 %v962
      %v1020 = vpop.f32.mrf.mxu0
      %v1021 = vadd.f32 %v949, %v1020
      %v1022 = vpop.f32.mrf.mxu0
      %v1023 = vadd.f32 %v949, %v1022
      %1024 = vmatmul.bf16.gmra.mxu0 %v965
      %v1025 = vpop.f32.mrf.mxu0
      %v1026 = vadd.f32 %v949, %v1025
      %v1027 = vpop.f32.mrf.mxu0
      %v1028 = vadd.f32 %v949, %v1027
      %1029 = vmatmul.bf16.gmra.mxu0 %v968
      %v1030 = vpop.f32.mrf.mxu0
      %v1031 = vadd.f32 %v949, %v1030
      %v1032 = vpop.f32.mrf.mxu0
      %v1033 = vadd.f32 %v949, %v1032
      %1034 = vmatmul.bf16.gmra.mxu0 %v971
      %v1035 = vpop.f32.mrf.mxu0
      %v1036 = vadd.f32 %v949, %v1035
      %v1037 = vpop.f32.mrf.mxu0
      %v1038 = vadd.f32 %v949, %v1037
      %1039 = vmatmul.bf16.gmra.mxu0 %v974
      %v1040 = vpop.f32.mrf.mxu0
      %v1041 = vadd.f32 %v949, %v1040
      %v1042 = vpop.f32.mrf.mxu0
      %v1043 = vadd.f32 %v949, %v1042
      %1044 = vmatmul.bf16.gmra.mxu0 %v977
      %v1045 = vpop.f32.mrf.mxu0
      %v1046 = vadd.f32 %v949, %v1045
      %v1047 = vpop.f32.mrf.mxu0
      %v1048 = vadd.f32 %v949, %v1047
      %1049 = vmatmul.bf16.gmra.mxu0 %v980
      %v1050 = vpop.f32.mrf.mxu0
      %v1051 = vadd.f32 %v949, %v1050
      %v1052 = vpop.f32.mrf.mxu0
      %v1053 = vadd.f32 %v949, %v1052
      %1054 = vmatmul.bf16.gmra.mxu0 %v983
      %v1055 = vpop.f32.mrf.mxu0
      %v1056 = vadd.f32 %v949, %v1055
      %v1057 = vpop.f32.mrf.mxu0
      %v1058 = vadd.f32 %v949, %v1057
      %1059 = vmatmul.bf16.gmra.mxu0 %v986
      %v1060 = vpop.f32.mrf.mxu0
      %v1061 = vadd.f32 %v949, %v1060
      %v1062 = vpop.f32.mrf.mxu0
      %v1063 = vadd.f32 %v949, %v1062
      %1064 = vmatmul.bf16.gmra.mxu0 %v989
      %v1065 = vpop.f32.mrf.mxu0
      %v1066 = vadd.f32 %v949, %v1065
      %v1067 = vpop.f32.mrf.mxu0
      %v1068 = vadd.f32 %v949, %v1067
      %1069 = vmatmul.bf16.gmra.mxu0 %v992
      %v1070 = vpop.f32.mrf.mxu0
      %v1071 = vadd.f32 %v949, %v1070
      %v1072 = vpop.f32.mrf.mxu0
      %v1073 = vadd.f32 %v949, %v1072
      %1074 = vmatmul.bf16.gmra.mxu0 %v995
      %v1075 = vpop.f32.mrf.mxu0
      %v1076 = vadd.f32 %v949, %v1075
      %v1077 = vpop.f32.mrf.mxu0
      %v1078 = vadd.f32 %v949, %v1077
      %1079 = vmatmul.bf16.gmra.mxu0 %v998
      %v1080 = vpop.f32.mrf.mxu0
      %v1081 = vadd.f32 %v949, %v1080
      %v1082 = vpop.f32.mrf.mxu0
      %v1083 = vadd.f32 %v949, %v1082
      %1084 = vmatmul.bf16.gmra.mxu0 %v1001
      %v1085 = vpop.f32.mrf.mxu0
      %v1086 = vadd.f32 %v949, %v1085
      %v1087 = vpop.f32.mrf.mxu0
      %v1088 = vadd.f32 %v949, %v1087
      %1089 = vmatmul.bf16.gmra.mxu0 %v1004
      %v1090 = vpop.f32.mrf.mxu0
      %v1091 = vadd.f32 %v949, %v1090
      %v1092 = vpop.f32.mrf.mxu0
      %v1093 = vadd.f32 %v949, %v1092
      %1094 = vdwg.mxu0
      %1095 = vst [vmem:[%s483] sm:$0xff] %v1016
      %1096 = vst [vmem:[%s483 + $0x8] sm:$0xff] %v1018
      %1097 = vst [vmem:[%s483 + $0x10] sm:$0xff] %v1021
      %1098 = vst [vmem:[%s483 + $0x18] sm:$0xff] %v1023
      %1099 = vst [vmem:[%s483 + $0x20] sm:$0xff] %v1026
      %1100 = vst [vmem:[%s483 + $0x28] sm:$0xff] %v1028
      %1101 = vst [vmem:[%s483 + $0x30] sm:$0xff] %v1031
      %1102 = vst [vmem:[%s483 + $0x38] sm:$0xff] %v1033
      %1103 = vst [vmem:[%s483 + $0x40] sm:$0xff] %v1036
      %1104 = vst [vmem:[%s483 + $0x48] sm:$0xff] %v1038
      %1105 = vst [vmem:[%s483 + $0x50] sm:$0xff] %v1041
      %1106 = vst [vmem:[%s483 + $0x58] sm:$0xff] %v1043
      %1107 = vst [vmem:[%s483 + $0x60] sm:$0xff] %v1046
      %1108 = vst [vmem:[%s483 + $0x68] sm:$0xff] %v1048
      %1109 = vst [vmem:[%s483 + $0x70] sm:$0xff] %v1051
      %1110 = vst [vmem:[%s483 + $0x78] sm:$0xff] %v1053
      %1111 = vst [vmem:[%s483 + $0x80] sm:$0xff] %v1056
      %1112 = vst [vmem:[%s483 + $0x88] sm:$0xff] %v1058
      %1113 = vst [vmem:[%s483 + $0x90] sm:$0xff] %v1061
      %1114 = vst [vmem:[%s483 + $0x98] sm:$0xff] %v1063
      %1115 = vst [vmem:[%s483 + $0xa0] sm:$0xff] %v1066
      %1116 = vst [vmem:[%s483 + $0xa8] sm:$0xff] %v1068
      %1117 = vst [vmem:[%s483 + $0xb0] sm:$0xff] %v1071
      %1118 = vst [vmem:[%s483 + $0xb8] sm:$0xff] %v1073
      %1119 = vst [vmem:[%s483 + $0xc0] sm:$0xff] %v1076
      %1120 = vst [vmem:[%s483 + $0xc8] sm:$0xff] %v1078
      %1121 = vst [vmem:[%s483 + $0xd0] sm:$0xff] %v1081
      %1122 = vst [vmem:[%s483 + $0xd8] sm:$0xff] %v1083
      %1123 = vst [vmem:[%s483 + $0xe0] sm:$0xff] %v1086
      %1124 = vst [vmem:[%s483 + $0xe8] sm:$0xff] %v1088
      %1125 = vst [vmem:[%s483 + $0xf0] sm:$0xff] %v1091
      %1126 = vst [vmem:[%s483 + $0xf8] sm:$0xff] %v1093
      %v1127 = vpack.c.bf16 %v1018, %v1016
      %v1128 = vpack.c.bf16 %v1023, %v1021
      %v1129 = vpack.c.bf16 %v1028, %v1026
      %v1130 = vpack.c.bf16 %v1033, %v1031
      %v1131 = vpack.c.bf16 %v1038, %v1036
      %v1132 = vpack.c.bf16 %v1043, %v1041
      %v1133 = vpack.c.bf16 %v1048, %v1046
      %v1134 = vpack.c.bf16 %v1053, %v1051
      %v1135 = vpack.c.bf16 %v1058, %v1056
      %v1136 = vpack.c.bf16 %v1063, %v1061
      %v1137 = vpack.c.bf16 %v1068, %v1066
      %v1138 = vpack.c.bf16 %v1073, %v1071
      %v1139 = vpack.c.bf16 %v1078, %v1076
      %v1140 = vpack.c.bf16 %v1083, %v1081
      %v1141 = vpack.c.bf16 %v1088, %v1086
      %v1142 = vpack.c.bf16 %v1093, %v1091
      %v1143 = vld [vmem:[%s7] sm:$0xf]
      %v1144 = vld [vmem:[%s7 + $0x4] sm:$0xf]
      %v1145 = vld [vmem:[%s7 + $0x8] sm:$0xf]
      %v1146 = vld [vmem:[%s7 + $0xc] sm:$0xf]
      %v1147 = vld [vmem:[%s7 + $0x10] sm:$0xf]
      %v1148 = vld [vmem:[%s7 + $0x14] sm:$0xf]
      %v1149 = vld [vmem:[%s7 + $0x18] sm:$0xf]
      %v1150 = vld [vmem:[%s7 + $0x1c] sm:$0xf]
      %v1151 = vld [vmem:[%s7 + $0x20] sm:$0xf]
      %v1152 = vld [vmem:[%s7 + $0x24] sm:$0xf]
      %v1153 = vld [vmem:[%s7 + $0x28] sm:$0xf]
      %v1154 = vld [vmem:[%s7 + $0x2c] sm:$0xf]
      %v1155 = vld [vmem:[%s7 + $0x30] sm:$0xf]
      %v1156 = vld [vmem:[%s7 + $0x34] sm:$0xf]
      %v1157 = vld [vmem:[%s7 + $0x38] sm:$0xf]
      %v1158 = vld [vmem:[%s7 + $0x3c] sm:$0xf]
      %v1159 = vld [vmem:[%s8] sm:$0x1]
      %v1161 = vperm.slane %v1159, 0
      %v1179 = vunpack.c.l.b16 %v1143
      %v1180 = vunpack.c.l.b16 %v1144
      %v1181 = vunpack.c.l.b16 %v1145
      %v1182 = vunpack.c.l.b16 %v1146
      %v1183 = vunpack.c.l.b16 %v1147
      %v1184 = vunpack.c.l.b16 %v1148
      %v1185 = vunpack.c.l.b16 %v1149
      %v1186 = vunpack.c.l.b16 %v1150
      %v1187 = vunpack.c.l.b16 %v1151
      %v1188 = vunpack.c.l.b16 %v1152
      %v1189 = vunpack.c.l.b16 %v1153
      %v1190 = vunpack.c.l.b16 %v1154
      %v1191 = vunpack.c.l.b16 %v1155
      %v1192 = vunpack.c.l.b16 %v1156
      %v1193 = vunpack.c.l.b16 %v1157
      %v1194 = vunpack.c.l.b16 %v1158
      %v1195 = vpack.c.b16 %v1180, %v1179
      %v1196 = vpack.c.b16 %v1182, %v1181
      %v1197 = vpack.c.b16 %v1184, %v1183
      %v1198 = vpack.c.b16 %v1186, %v1185
      %v1199 = vpack.c.b16 %v1188, %v1187
      %v1200 = vpack.c.b16 %v1190, %v1189
      %v1201 = vpack.c.b16 %v1192, %v1191
      %v1202 = vpack.c.b16 %v1194, %v1193
      %1211 = vmatpush.bf16.msra.mxu0 %v1202
      %1212 = vmatpush.bf16.msra.mxu0 %v1201
      %1213 = vmatpush.bf16.msra.mxu0 %v1200
      %1214 = vmatpush.bf16.msra.mxu0 %v1199
      %1215 = vmatpush.bf16.msra.mxu0 %v1198
      %1216 = vmatpush.bf16.msra.mxu0 %v1197
      %1217 = vmatpush.bf16.msra.mxu0 %v1196
      %1218 = vmatpush.bf16.msra.mxu0 %v1195
      %1219 = vmatmul.bf16.gmra.mxu0 %v1127
      %v1220 = vpop.f32.mrf.mxu0
      %v1221 = vadd.f32 %v1161, %v1220
      %v1222 = vpop.f32.mrf.mxu0
      %v1223 = vadd.f32 %v1161, %v1222
      %1224 = vmatmul.bf16.gmra.mxu0 %v1128
      %v1225 = vpop.f32.mrf.mxu0
      %v1226 = vadd.f32 %v1161, %v1225
      %v1227 = vpop.f32.mrf.mxu0
      %v1228 = vadd.f32 %v1161, %v1227
      %1229 = vmatmul.bf16.gmra.mxu0 %v1129
      %v1230 = vpop.f32.mrf.mxu0
      %v1231 = vadd.f32 %v1161, %v1230
      %v1232 = vpop.f32.mrf.mxu0
      %v1233 = vadd.f32 %v1161, %v1232
      %1234 = vmatmul.bf16.gmra.mxu0 %v1130
      %v1235 = vpop.f32.mrf.mxu0
      %v1236 = vadd.f32 %v1161, %v1235
      %v1237 = vpop.f32.mrf.mxu0
      %v1238 = vadd.f32 %v1161, %v1237
      %1239 = vmatmul.bf16.gmra.mxu0 %v1131
      %v1240 = vpop.f32.mrf.mxu0
      %v1241 = vadd.f32 %v1161, %v1240
      %v1242 = vpop.f32.mrf.mxu0
      %v1243 = vadd.f32 %v1161, %v1242
      %1244 = vmatmul.bf16.gmra.mxu0 %v1132
      %v1245 = vpop.f32.mrf.mxu0
      %v1246 = vadd.f32 %v1161, %v1245
      %v1247 = vpop.f32.mrf.mxu0
      %v1248 = vadd.f32 %v1161, %v1247
      %1249 = vmatmul.bf16.gmra.mxu0 %v1133
      %v1250 = vpop.f32.mrf.mxu0
      %v1251 = vadd.f32 %v1161, %v1250
      %v1252 = vpop.f32.mrf.mxu0
      %v1253 = vadd.f32 %v1161, %v1252
      %1254 = vmatmul.bf16.gmra.mxu0 %v1134
      %v1255 = vpop.f32.mrf.mxu0
      %v1256 = vadd.f32 %v1161, %v1255
      %v1257 = vpop.f32.mrf.mxu0
      %v1258 = vadd.f32 %v1161, %v1257
      %1259 = vmatmul.bf16.gmra.mxu0 %v1135
      %v1260 = vpop.f32.mrf.mxu0
      %v1261 = vadd.f32 %v1161, %v1260
      %v1262 = vpop.f32.mrf.mxu0
      %v1263 = vadd.f32 %v1161, %v1262
      %1264 = vmatmul.bf16.gmra.mxu0 %v1136
      %v1265 = vpop.f32.mrf.mxu0
      %v1266 = vadd.f32 %v1161, %v1265
      %v1267 = vpop.f32.mrf.mxu0
      %v1268 = vadd.f32 %v1161, %v1267
      %1269 = vmatmul.bf16.gmra.mxu0 %v1137
      %v1270 = vpop.f32.mrf.mxu0
      %v1271 = vadd.f32 %v1161, %v1270
      %v1272 = vpop.f32.mrf.mxu0
      %v1273 = vadd.f32 %v1161, %v1272
      %1274 = vmatmul.bf16.gmra.mxu0 %v1138
      %v1275 = vpop.f32.mrf.mxu0
      %v1276 = vadd.f32 %v1161, %v1275
      %v1277 = vpop.f32.mrf.mxu0
      %v1278 = vadd.f32 %v1161, %v1277
      %1279 = vmatmul.bf16.gmra.mxu0 %v1139
      %v1280 = vpop.f32.mrf.mxu0
      %v1281 = vadd.f32 %v1161, %v1280
      %v1282 = vpop.f32.mrf.mxu0
      %v1283 = vadd.f32 %v1161, %v1282
      %1284 = vmatmul.bf16.gmra.mxu0 %v1140
      %v1285 = vpop.f32.mrf.mxu0
      %v1286 = vadd.f32 %v1161, %v1285
      %v1287 = vpop.f32.mrf.mxu0
      %v1288 = vadd.f32 %v1161, %v1287
      %1289 = vmatmul.bf16.gmra.mxu0 %v1141
      %v1290 = vpop.f32.mrf.mxu0
      %v1291 = vadd.f32 %v1161, %v1290
      %v1292 = vpop.f32.mrf.mxu0
      %v1293 = vadd.f32 %v1161, %v1292
      %1294 = vmatmul.bf16.gmra.mxu0 %v1142
      %v1295 = vpop.f32.mrf.mxu0
      %v1296 = vadd.f32 %v1161, %v1295
      %v1297 = vpop.f32.mrf.mxu0
      %v1298 = vadd.f32 %v1161, %v1297
      %1299 = vdwg.mxu0
      %v1300 = vmax.f32 %v1221, 0.0
      %v1301 = vmax.f32 %v1223, 0.0
      %v1302 = vmax.f32 %v1226, 0.0
      %v1303 = vmax.f32 %v1228, 0.0
      %v1304 = vmax.f32 %v1231, 0.0
      %v1305 = vmax.f32 %v1233, 0.0
      %v1306 = vmax.f32 %v1236, 0.0
      %v1307 = vmax.f32 %v1238, 0.0
      %v1308 = vmax.f32 %v1241, 0.0
      %v1309 = vmax.f32 %v1243, 0.0
      %v1310 = vmax.f32 %v1246, 0.0
      %v1311 = vmax.f32 %v1248, 0.0
      %v1312 = vmax.f32 %v1251, 0.0
      %v1313 = vmax.f32 %v1253, 0.0
      %v1314 = vmax.f32 %v1256, 0.0
      %v1315 = vmax.f32 %v1258, 0.0
      %v1316 = vmax.f32 %v1261, 0.0
      %v1317 = vmax.f32 %v1263, 0.0
      %v1318 = vmax.f32 %v1266, 0.0
      %v1319 = vmax.f32 %v1268, 0.0
      %v1320 = vmax.f32 %v1271, 0.0
      %v1321 = vmax.f32 %v1273, 0.0
      %v1322 = vmax.f32 %v1276, 0.0
      %v1323 = vmax.f32 %v1278, 0.0
      %v1324 = vmax.f32 %v1281, 0.0
      %v1325 = vmax.f32 %v1283, 0.0
      %v1326 = vmax.f32 %v1286, 0.0
      %v1327 = vmax.f32 %v1288, 0.0
      %v1328 = vmax.f32 %v1291, 0.0
      %v1329 = vmax.f32 %v1293, 0.0
      %v1330 = vmax.f32 %v1296, 0.0
      %v1331 = vmax.f32 %v1298, 0.0
      %v1332 = vpack.c.bf16 %v1301, %v1300
      %v1333 = vpack.c.bf16 %v1303, %v1302
      %v1334 = vpack.c.bf16 %v1305, %v1304
      %v1335 = vpack.c.bf16 %v1307, %v1306
      %v1336 = vpack.c.bf16 %v1309, %v1308
      %v1337 = vpack.c.bf16 %v1311, %v1310
      %v1338 = vpack.c.bf16 %v1313, %v1312
      %v1339 = vpack.c.bf16 %v1315, %v1314
      %v1340 = vpack.c.bf16 %v1317, %v1316
      %v1341 = vpack.c.bf16 %v1319, %v1318
      %v1342 = vpack.c.bf16 %v1321, %v1320
      %v1343 = vpack.c.bf16 %v1323, %v1322
      %v1344 = vpack.c.bf16 %v1325, %v1324
      %v1345 = vpack.c.bf16 %v1327, %v1326
      %v1346 = vpack.c.bf16 %v1329, %v1328
      %v1347 = vpack.c.bf16 %v1331, %v1330
      %v1348 = vld [vmem:[%s9] sm:$0xf]
      %v1349 = vld [vmem:[%s9 + $0x4] sm:$0xf]
      %v1350 = vld [vmem:[%s10] sm:$0x1]
      %v1352 = vperm.slane %v1350, 0
      %v1356 = vunpack.c.l.b16 %v1348
      %v1357 = vunpack.c.l.b16 %v1349
      %v1358 = vpack.c.b16 %v1357, %v1356
      %v1361 = vsel %vm957, %v1332, 0
      %v1364 = vsel %vm957, %v1333, 0
      %v1367 = vsel %vm957, %v1334, 0
      %v1370 = vsel %vm957, %v1335, 0
      %v1373 = vsel %vm957, %v1336, 0
      %v1376 = vsel %vm957, %v1337, 0
      %v1379 = vsel %vm957, %v1338, 0
      %v1382 = vsel %vm957, %v1339, 0
      %v1385 = vsel %vm957, %v1340, 0
      %v1388 = vsel %vm957, %v1341, 0
      %v1391 = vsel %vm957, %v1342, 0
      %v1394 = vsel %vm957, %v1343, 0
      %v1397 = vsel %vm957, %v1344, 0
      %v1400 = vsel %vm957, %v1345, 0
      %v1403 = vsel %vm957, %v1346, 0
      %v1406 = vsel %vm957, %v1347, 0
      %1408 = vmatpush.bf16.msra.mxu0 0
      %1409 = vmatpush.bf16.msra.mxu0 0
      %1410 = vmatpush.bf16.msra.mxu0 0
      %1411 = vmatpush.bf16.msra.mxu0 0
      %1412 = vmatpush.bf16.msra.mxu0 0
      %1413 = vmatpush.bf16.msra.mxu0 0
      %1414 = vmatpush.bf16.msra.mxu0 0
      %1415 = vmatpush.bf16.msra.mxu0 %v1358
      %1416 = vmatmul.bf16.gmra.mxu0 %v1361
      %v1417 = vpop.f32.mrf.mxu0
      %v1418 = vadd.f32 %v1352, %v1417
      %v1419 = vpop.f32.mrf.mxu0
      %v1420 = vadd.f32 %v1352, %v1419
      %1421 = vmatmul.bf16.gmra.mxu0 %v1364
      %v1422 = vpop.f32.mrf.mxu0
      %v1423 = vadd.f32 %v1352, %v1422
      %v1424 = vpop.f32.mrf.mxu0
      %v1425 = vadd.f32 %v1352, %v1424
      %1426 = vmatmul.bf16.gmra.mxu0 %v1367
      %v1427 = vpop.f32.mrf.mxu0
      %v1428 = vadd.f32 %v1352, %v1427
      %v1429 = vpop.f32.mrf.mxu0
      %v1430 = vadd.f32 %v1352, %v1429
      %1431 = vmatmul.bf16.gmra.mxu0 %v1370
      %v1432 = vpop.f32.mrf.mxu0
      %v1433 = vadd.f32 %v1352, %v1432
      %v1434 = vpop.f32.mrf.mxu0
      %v1435 = vadd.f32 %v1352, %v1434
      %1436 = vmatmul.bf16.gmra.mxu0 %v1373
      %v1437 = vpop.f32.mrf.mxu0
      %v1438 = vadd.f32 %v1352, %v1437
      %v1439 = vpop.f32.mrf.mxu0
      %v1440 = vadd.f32 %v1352, %v1439
      %1441 = vmatmul.bf16.gmra.mxu0 %v1376
      %v1442 = vpop.f32.mrf.mxu0
      %v1443 = vadd.f32 %v1352, %v1442
      %v1444 = vpop.f32.mrf.mxu0
      %v1445 = vadd.f32 %v1352, %v1444
      %1446 = vmatmul.bf16.gmra.mxu0 %v1379
      %v1447 = vpop.f32.mrf.mxu0
      %v1448 = vadd.f32 %v1352, %v1447
      %v1449 = vpop.f32.mrf.mxu0
      %v1450 = vadd.f32 %v1352, %v1449
      %1451 = vmatmul.bf16.gmra.mxu0 %v1382
      %v1452 = vpop.f32.mrf.mxu0
      %v1453 = vadd.f32 %v1352, %v1452
      %v1454 = vpop.f32.mrf.mxu0
      %v1455 = vadd.f32 %v1352, %v1454
      %1456 = vmatmul.bf16.gmra.mxu0 %v1385
      %v1457 = vpop.f32.mrf.mxu0
      %v1458 = vadd.f32 %v1352, %v1457
      %v1459 = vpop.f32.mrf.mxu0
      %v1460 = vadd.f32 %v1352, %v1459
      %1461 = vmatmul.bf16.gmra.mxu0 %v1388
      %v1462 = vpop.f32.mrf.mxu0
      %v1463 = vadd.f32 %v1352, %v1462
      %v1464 = vpop.f32.mrf.mxu0
      %v1465 = vadd.f32 %v1352, %v1464
      %1466 = vmatmul.bf16.gmra.mxu0 %v1391
      %v1467 = vpop.f32.mrf.mxu0
      %v1468 = vadd.f32 %v1352, %v1467
      %v1469 = vpop.f32.mrf.mxu0
      %v1470 = vadd.f32 %v1352, %v1469
      %1471 = vmatmul.bf16.gmra.mxu0 %v1394
      %v1472 = vpop.f32.mrf.mxu0
      %v1473 = vadd.f32 %v1352, %v1472
      %v1474 = vpop.f32.mrf.mxu0
      %v1475 = vadd.f32 %v1352, %v1474
      %1476 = vmatmul.bf16.gmra.mxu0 %v1397
      %v1477 = vpop.f32.mrf.mxu0
      %v1478 = vadd.f32 %v1352, %v1477
      %v1479 = vpop.f32.mrf.mxu0
      %v1480 = vadd.f32 %v1352, %v1479
      %1481 = vmatmul.bf16.gmra.mxu0 %v1400
      %v1482 = vpop.f32.mrf.mxu0
      %v1483 = vadd.f32 %v1352, %v1482
      %v1484 = vpop.f32.mrf.mxu0
      %v1485 = vadd.f32 %v1352, %v1484
      %1486 = vmatmul.bf16.gmra.mxu0 %v1403
      %v1487 = vpop.f32.mrf.mxu0
      %v1488 = vadd.f32 %v1352, %v1487
      %v1489 = vpop.f32.mrf.mxu0
      %v1490 = vadd.f32 %v1352, %v1489
      %1491 = vmatmul.bf16.gmra.mxu0 %v1406
      %v1492 = vpop.f32.mrf.mxu0
      %v1493 = vadd.f32 %v1352, %v1492
      %v1494 = vpop.f32.mrf.mxu0
      %v1495 = vadd.f32 %v1352, %v1494
      %1496 = vdwg.mxu0
      %v1497 = vmax.f32 %v1418, 0.0
      %v1498 = vmax.f32 %v1420, 0.0
      %v1499 = vmax.f32 %v1423, 0.0
      %v1500 = vmax.f32 %v1425, 0.0
      %v1501 = vmax.f32 %v1428, 0.0
      %v1502 = vmax.f32 %v1430, 0.0
      %v1503 = vmax.f32 %v1433, 0.0
      %v1504 = vmax.f32 %v1435, 0.0
      %v1505 = vmax.f32 %v1438, 0.0
      %v1506 = vmax.f32 %v1440, 0.0
      %v1507 = vmax.f32 %v1443, 0.0
      %v1508 = vmax.f32 %v1445, 0.0
      %v1509 = vmax.f32 %v1448, 0.0
      %v1510 = vmax.f32 %v1450, 0.0
      %v1511 = vmax.f32 %v1453, 0.0
      %v1512 = vmax.f32 %v1455, 0.0
      %v1513 = vmax.f32 %v1458, 0.0
      %v1514 = vmax.f32 %v1460, 0.0
      %v1515 = vmax.f32 %v1463, 0.0
      %v1516 = vmax.f32 %v1465, 0.0
      %v1517 = vmax.f32 %v1468, 0.0
      %v1518 = vmax.f32 %v1470, 0.0
      %v1519 = vmax.f32 %v1473, 0.0
      %v1520 = vmax.f32 %v1475, 0.0
      %v1521 = vmax.f32 %v1478, 0.0
      %v1522 = vmax.f32 %v1480, 0.0
      %v1523 = vmax.f32 %v1483, 0.0
      %v1524 = vmax.f32 %v1485, 0.0
      %v1525 = vmax.f32 %v1488, 0.0
      %v1526 = vmax.f32 %v1490, 0.0
      %v1527 = vmax.f32 %v1493, 0.0
      %v1528 = vmax.f32 %v1495, 0.0
      %v1529 = vpack.c.bf16 %v1498, %v1497
      %v1530 = vpack.c.bf16 %v1500, %v1499
      %v1531 = vpack.c.bf16 %v1502, %v1501
      %v1532 = vpack.c.bf16 %v1504, %v1503
      %v1533 = vpack.c.bf16 %v1506, %v1505
      %v1534 = vpack.c.bf16 %v1508, %v1507
      %v1535 = vpack.c.bf16 %v1510, %v1509
      %v1536 = vpack.c.bf16 %v1512, %v1511
      %v1537 = vpack.c.bf16 %v1514, %v1513
      %v1538 = vpack.c.bf16 %v1516, %v1515
      %v1539 = vpack.c.bf16 %v1518, %v1517
      %v1540 = vpack.c.bf16 %v1520, %v1519
      %v1541 = vpack.c.bf16 %v1522, %v1521
      %v1542 = vpack.c.bf16 %v1524, %v1523
      %v1543 = vpack.c.bf16 %v1526, %v1525
      %v1544 = vpack.c.bf16 %v1528, %v1527
      %v1545 = vld [vmem:[%s11] sm:$0xf]
      %v1546 = vld [vmem:[%s11 + $0x4] sm:$0xf]
      %v1547 = vld [vmem:[%s11 + $0x8] sm:$0xf]
      %v1548 = vld [vmem:[%s11 + $0xc] sm:$0xf]
      %v1549 = vld [vmem:[%s12] sm:$0x1]
      %v1551 = vperm.slane %v1549, 0
      %v1557 = vunpack.c.l.b16 %v1545
      %v1558 = vunpack.c.l.b16 %v1546
      %v1559 = vunpack.c.l.b16 %v1547
      %v1560 = vunpack.c.l.b16 %v1548
      %v1561 = vpack.c.b16 %v1558, %v1557
      %v1562 = vpack.c.b16 %v1560, %v1559
      %v1566 = vsel %vm554, %v1529, 0
      %v1569 = vsel %vm554, %v1530, 0
      %v1572 = vsel %vm554, %v1531, 0
      %v1575 = vsel %vm554, %v1532, 0
      %v1578 = vsel %vm554, %v1533, 0
      %v1581 = vsel %vm554, %v1534, 0
      %v1584 = vsel %vm554, %v1535, 0
      %v1587 = vsel %vm554, %v1536, 0
      %v1590 = vsel %vm554, %v1537, 0
      %v1593 = vsel %vm554, %v1538, 0
      %v1596 = vsel %vm554, %v1539, 0
      %v1599 = vsel %vm554, %v1540, 0
      %v1602 = vsel %vm554, %v1541, 0
      %v1605 = vsel %vm554, %v1542, 0
      %v1608 = vsel %vm554, %v1543, 0
      %v1611 = vsel %vm554, %v1544, 0
      %1613 = vmatpush.bf16.msra.mxu0 0
      %1614 = vmatpush.bf16.msra.mxu0 0
      %1615 = vmatpush.bf16.msra.mxu0 0
      %1616 = vmatpush.bf16.msra.mxu0 0
      %1617 = vmatpush.bf16.msra.mxu0 0
      %1618 = vmatpush.bf16.msra.mxu0 0
      %1619 = vmatpush.bf16.msra.mxu0 %v1562
      %1620 = vmatpush.bf16.msra.mxu0 %v1561
      %1621 = vmatmul.bf16.gmra.mxu0 %v1566
      %v1622 = vpop.f32.mrf.mxu0
      %v1623 = vadd.f32 %v1551, %v1622
      %v1624 = vpop.f32.mrf.mxu0
      %v1625 = vadd.f32 %v1551, %v1624
      %1626 = vmatmul.bf16.gmra.mxu0 %v1569
      %v1627 = vpop.f32.mrf.mxu0
      %v1628 = vadd.f32 %v1551, %v1627
      %v1629 = vpop.f32.mrf.mxu0
      %v1630 = vadd.f32 %v1551, %v1629
      %1631 = vmatmul.bf16.gmra.mxu0 %v1572
      %v1632 = vpop.f32.mrf.mxu0
      %v1633 = vadd.f32 %v1551, %v1632
      %v1634 = vpop.f32.mrf.mxu0
      %v1635 = vadd.f32 %v1551, %v1634
      %1636 = vmatmul.bf16.gmra.mxu0 %v1575
      %v1637 = vpop.f32.mrf.mxu0
      %v1638 = vadd.f32 %v1551, %v1637
      %v1639 = vpop.f32.mrf.mxu0
      %v1640 = vadd.f32 %v1551, %v1639
      %1641 = vmatmul.bf16.gmra.mxu0 %v1578
      %v1642 = vpop.f32.mrf.mxu0
      %v1643 = vadd.f32 %v1551, %v1642
      %v1644 = vpop.f32.mrf.mxu0
      %v1645 = vadd.f32 %v1551, %v1644
      %1646 = vmatmul.bf16.gmra.mxu0 %v1581
      %v1647 = vpop.f32.mrf.mxu0
      %v1648 = vadd.f32 %v1551, %v1647
      %v1649 = vpop.f32.mrf.mxu0
      %v1650 = vadd.f32 %v1551, %v1649
      %1651 = vmatmul.bf16.gmra.mxu0 %v1584
      %v1652 = vpop.f32.mrf.mxu0
      %v1653 = vadd.f32 %v1551, %v1652
      %v1654 = vpop.f32.mrf.mxu0
      %v1655 = vadd.f32 %v1551, %v1654
      %1656 = vmatmul.bf16.gmra.mxu0 %v1587
      %v1657 = vpop.f32.mrf.mxu0
      %v1658 = vadd.f32 %v1551, %v1657
      %v1659 = vpop.f32.mrf.mxu0
      %v1660 = vadd.f32 %v1551, %v1659
      %1661 = vmatmul.bf16.gmra.mxu0 %v1590
      %v1662 = vpop.f32.mrf.mxu0
      %v1663 = vadd.f32 %v1551, %v1662
      %v1664 = vpop.f32.mrf.mxu0
      %v1665 = vadd.f32 %v1551, %v1664
      %1666 = vmatmul.bf16.gmra.mxu0 %v1593
      %v1667 = vpop.f32.mrf.mxu0
      %v1668 = vadd.f32 %v1551, %v1667
      %v1669 = vpop.f32.mrf.mxu0
      %v1670 = vadd.f32 %v1551, %v1669
      %1671 = vmatmul.bf16.gmra.mxu0 %v1596
      %v1672 = vpop.f32.mrf.mxu0
      %v1673 = vadd.f32 %v1551, %v1672
      %v1674 = vpop.f32.mrf.mxu0
      %v1675 = vadd.f32 %v1551, %v1674
      %1676 = vmatmul.bf16.gmra.mxu0 %v1599
      %v1677 = vpop.f32.mrf.mxu0
      %v1678 = vadd.f32 %v1551, %v1677
      %v1679 = vpop.f32.mrf.mxu0
      %v1680 = vadd.f32 %v1551, %v1679
      %1681 = vmatmul.bf16.gmra.mxu0 %v1602
      %v1682 = vpop.f32.mrf.mxu0
      %v1683 = vadd.f32 %v1551, %v1682
      %v1684 = vpop.f32.mrf.mxu0
      %v1685 = vadd.f32 %v1551, %v1684
      %1686 = vmatmul.bf16.gmra.mxu0 %v1605
      %v1687 = vpop.f32.mrf.mxu0
      %v1688 = vadd.f32 %v1551, %v1687
      %v1689 = vpop.f32.mrf.mxu0
      %v1690 = vadd.f32 %v1551, %v1689
      %1691 = vmatmul.bf16.gmra.mxu0 %v1608
      %v1692 = vpop.f32.mrf.mxu0
      %v1693 = vadd.f32 %v1551, %v1692
      %v1694 = vpop.f32.mrf.mxu0
      %v1695 = vadd.f32 %v1551, %v1694
      %1696 = vmatmul.bf16.gmra.mxu0 %v1611
      %v1697 = vpop.f32.mrf.mxu0
      %v1698 = vadd.f32 %v1551, %v1697
      %v1699 = vpop.f32.mrf.mxu0
      %v1700 = vadd.f32 %v1551, %v1699
      %1701 = vdwg.mxu0
      %1702 = vst.msk [vmem:[%s477] sm:$0xff] %vm554, %v1623
      %1703 = vst.msk [vmem:[%s477 + $0x8] sm:$0xff] %vm554, %v1625
      %1704 = vst.msk [vmem:[%s477 + $0x10] sm:$0xff] %vm554, %v1628
      %1705 = vst.msk [vmem:[%s477 + $0x18] sm:$0xff] %vm554, %v1630
      %1706 = vst.msk [vmem:[%s477 + $0x20] sm:$0xff] %vm554, %v1633
      %1707 = vst.msk [vmem:[%s477 + $0x28] sm:$0xff] %vm554, %v1635
      %1708 = vst.msk [vmem:[%s477 + $0x30] sm:$0xff] %vm554, %v1638
      %1709 = vst.msk [vmem:[%s477 + $0x38] sm:$0xff] %vm554, %v1640
      %1710 = vst.msk [vmem:[%s477 + $0x40] sm:$0xff] %vm554, %v1643
      %1711 = vst.msk [vmem:[%s477 + $0x48] sm:$0xff] %vm554, %v1645
      %1712 = vst.msk [vmem:[%s477 + $0x50] sm:$0xff] %vm554, %v1648
      %1713 = vst.msk [vmem:[%s477 + $0x58] sm:$0xff] %vm554, %v1650
      %1714 = vst.msk [vmem:[%s477 + $0x60] sm:$0xff] %vm554, %v1653
      %1715 = vst.msk [vmem:[%s477 + $0x68] sm:$0xff] %vm554, %v1655
      %1716 = vst.msk [vmem:[%s477 + $0x70] sm:$0xff] %vm554, %v1658
      %1717 = vst.msk [vmem:[%s477 + $0x78] sm:$0xff] %vm554, %v1660
      %1718 = vst.msk [vmem:[%s477 + $0x80] sm:$0xff] %vm554, %v1663
      %1719 = vst.msk [vmem:[%s477 + $0x88] sm:$0xff] %vm554, %v1665
      %1720 = vst.msk [vmem:[%s477 + $0x90] sm:$0xff] %vm554, %v1668
      %1721 = vst.msk [vmem:[%s477 + $0x98] sm:$0xff] %vm554, %v1670
      %1722 = vst.msk [vmem:[%s477 + $0xa0] sm:$0xff] %vm554, %v1673
      %1723 = vst.msk [vmem:[%s477 + $0xa8] sm:$0xff] %vm554, %v1675
      %1724 = vst.msk [vmem:[%s477 + $0xb0] sm:$0xff] %vm554, %v1678
      %1725 = vst.msk [vmem:[%s477 + $0xb8] sm:$0xff] %vm554, %v1680
      %1726 = vst.msk [vmem:[%s477 + $0xc0] sm:$0xff] %vm554, %v1683
      %1727 = vst.msk [vmem:[%s477 + $0xc8] sm:$0xff] %vm554, %v1685
      %1728 = vst.msk [vmem:[%s477 + $0xd0] sm:$0xff] %vm554, %v1688
      %1729 = vst.msk [vmem:[%s477 + $0xd8] sm:$0xff] %vm554, %v1690
      %1730 = vst.msk [vmem:[%s477 + $0xe0] sm:$0xff] %vm554, %v1693
      %1731 = vst.msk [vmem:[%s477 + $0xe8] sm:$0xff] %vm554, %v1695
      %1732 = vst.msk [vmem:[%s477 + $0xf0] sm:$0xff] %vm554, %v1698
      %1733 = vst.msk [vmem:[%s477 + $0xf8] sm:$0xff] %vm554, %v1700
      %s1734 = smul.u32 32, %s26
      %p1735 = scmp.lt.s32.totalorder %s1734, 63
      %s1736 = scalar_select %p1735, %s1734, 63
      %s1737 = smul.addr %s1736, 8
      %s1738 = scalar_lea.vmem %s13, %s1737
      %s1739 = smul.u32 32, %s26
      %p1740 = scmp.lt.s32.totalorder %s1739, 63
      %s1741 = scalar_select %p1740, %s1739, 63
      %s1742 = smul.addr %s1741, 8
      %s1743 = scalar_lea.vmem %s14, %s1742
      // Predicated region
      $region73: #{anomaly_detector_forward.1} parent=71 // pred_check
        %p1744 = pneg %p322
      $region74: #{anomaly_detector_forward.1} parent=71 // pred_check_branch
        %1746 = sbr.rel (%p1744) target = $region76
      $region75: #{anomaly_detector_forward.1} parent=71 // pred_region
        %s1747 = smul.u32 32, %s26
      $region76: #{anomaly_detector_forward.1} parent=71 // pred_fallthru
        _
      // Predicated region
      $region77: #{anomaly_detector_forward.1} parent=71 // pred_check
        %p1748 = pneg %p348
      $region78: #{anomaly_detector_forward.1} parent=71 // pred_check_branch
        %1750 = sbr.rel (%p1748) target = $region80
      $region79: #{anomaly_detector_forward.1} parent=71 // pred_region
        %s1751 = smul.u32 32, %s26
      $region80: #{anomaly_detector_forward.1} parent=71 // pred_fallthru
        _
    $region72: #{anomaly_detector_forward.1} parent=5 // pred_fallthru
      _
    %p1752 = scmp.le.s32.totalorder 2, %s21
    // Predicated region
    $region81: #{anomaly_detector_forward.1} parent=5 // pred_check
      %p1753 = pneg %p1752
    $region82: #{anomaly_detector_forward.1} parent=5 // pred_check_branch
      %1755 = sbr.rel (%p1753) target = $region84
    $region83: #{anomaly_detector_forward.1} parent=5 // pred_region
      %s1756 = ssub.s32 %s21, 2
      // Predicated region
      $region85: #{anomaly_detector_forward.1} parent=83 // pred_check
        %p1757 = pneg %p328
      $region86: #{anomaly_detector_forward.1} parent=83 // pred_check_branch
        %1759 = sbr.rel (%p1757) target = $region88
      $region87: #{anomaly_detector_forward.1} parent=83 // pred_region
        %s1760 = smul.u32 32, %s27
        %p1761 = scmp.lt.s32.totalorder %s1760, 63
        %s1762 = scalar_select %p1761, %s1760, 63
        %s1763 = smul.addr %s1762, 8
        %s1764 = scalar_lea.vmem %s13, %s1763
      $region88: #{anomaly_detector_forward.1} parent=83 // pred_fallthru
        _
      // Predicated region
      $region89: #{anomaly_detector_forward.1} parent=83 // pred_check
        %p1765 = pneg %p354
      $region90: #{anomaly_detector_forward.1} parent=83 // pred_check_branch
        %1767 = sbr.rel (%p1765) target = $region92
      $region91: #{anomaly_detector_forward.1} parent=83 // pred_region
        %s1768 = smul.u32 32, %s27
        %p1769 = scmp.lt.s32.totalorder %s1768, 63
        %s1770 = scalar_select %p1769, %s1768, 63
        %s1771 = smul.addr %s1770, 8
        %s1772 = scalar_lea.vmem %s14, %s1771
      $region92: #{anomaly_detector_forward.1} parent=83 // pred_fallthru
        _
    $region84: #{anomaly_detector_forward.1} parent=5 // pred_fallthru
      _
  $region6: #{anomaly_detector_forward.1} parent=0 // loop_footer
    %s25 = sadd.s32 1, %s21
  $region7: #{anomaly_detector_forward.1} parent=0 // loop_footer_branch
    %20 = sbr.rel target = $region3
  $region8: #{anomaly_detector_forward.1} parent=0 // loop_exit
    _

</llo_original>
